<compile_context>
chip_gen: v5e
topology: v5e:2x2
jax: 0.10.0
libtpu: 0.0.40
codegen_flags: <defaults>
</compile_context>

<pallas_src>
import math

import jax
import jax.numpy as jnp
from jax.experimental import pallas as pl
from jax.experimental.pallas import tpu as pltpu


def _round_up(x, m):
    return ((x + m - 1) // m) * m


# ----------------------------------------------------------------------------
# Fused kernel: encoder + all TCN layers + decoder on one VMEM-resident tile
# ----------------------------------------------------------------------------
def _make_fused_kernel(dilations, L, TL, Rpad, P):
    N = len(dilations)

    def kernel(fw_ref, enc_w_ref, tcn_w_ref, tcn_b_ref, dec_w_ref,
               out_ref, hbuf):
        t = pl.program_id(1)
        pos0 = t * TL - Rpad          # global frame index of buffer column 0

        # ---- Encoder: Conv1d(1, C, K, stride=S, bias=False) + ReLU ----------
        # Host-side zero padding of out-of-range frames + no bias means the
        # encoder output is exactly the zero padding the first TCN layer needs.
        win = fw_ref[0, 0].astype(jnp.bfloat16)                    # [K, P]
        enc = jnp.dot(enc_w_ref[...], win,
                      preferred_element_type=jnp.float32)          # [C, P] f32
        hbuf[...] = jnp.maximum(enc, 0.0).astype(jnp.bfloat16)

        # ---- Hoisted frame-validity mask (Conv1d zero-padding semantics) ----
        gpos = pos0 + jax.lax.broadcasted_iota(jnp.int32, (1, P), 1)
        maskf = jnp.logical_and(gpos >= 0, gpos < L).astype(jnp.float32)

        # ---- Separator: dilated Conv1d(k=3, dilation=d, padding=d) + ReLU ---
        # Each tap is a full-buffer matmul; taps are aligned with XLU rolls.
        # Column r of a matmul only reads column r of the input, and the rolls
        # only move data by +/- d, so the cyclic wrap pollutes only halo
        # columns that are never consumed downstream.
        h_last = None
        for i, d in enumerate(dilations):
            xc = hbuf[...]                                         # [C, P] bf16
            z0 = jnp.dot(tcn_w_ref[3 * i + 0], xc,
                         preferred_element_type=jnp.float32)       # x[t - d] tap
            z1 = jnp.dot(tcn_w_ref[3 * i + 1], xc,
                         preferred_element_type=jnp.float32)       # x[t] tap
            z2 = jnp.dot(tcn_w_ref[3 * i + 2], xc,
                         preferred_element_type=jnp.float32)       # x[t + d] tap
            acc = (pltpu.roll(z0, d, 1) + z1 + pltpu.roll(z2, P - d, 1)
                   + tcn_b_ref[i])                                  # [C, P] f32
            y = jnp.maximum(acc, 0.0)
            if i < N - 1:
                # Re-impose zero padding for the next layer: frames outside
                # [0, L) were just given ReLU(bias) and must read as zero.
                hbuf[...] = (y * maskf).astype(jnp.bfloat16)
            else:
                h_last = y    # last layer: host slices frames >= L instead

        # ---- Decoder: ConvTranspose1d(C, 1, K, stride=S, bias=False) --------
        # One fused [K, C] x [C, P] matmul, one lane-dense store; the per-frame
        # K-sample contributions are overlap-added on the host (K == 2 * S).
        out_ref[0, 0] = jnp.dot(dec_w_ref[...], h_last.astype(jnp.bfloat16),
                                preferred_element_type=jnp.float32)

    return kernel


# ----------------------------------------------------------------------------
# Full ConvTasNet forward
# ----------------------------------------------------------------------------
def conv_tasnet_forward(x, params, kernel_size=16, stride=8,
                        time_tile=2048, vmem_limit_bytes=64 * 1024 * 1024):
    """x: [B, 1, T] float32 (PyTorch NCL). Returns [B, 1, (L-1)*stride + K]."""
    B, _, T = x.shape
    K, S = kernel_size, stride
    assert K == 2 * S, "fused encoder/decoder assumes kernel_size == 2 * stride"
    L = (T - K) // S + 1
    C = params["enc_w"].shape[0]
    num_layers = len(params["tcn_w"])
    assert num_layers >= 1
    dilations = tuple(2 ** i for i in range(num_layers))
    R = sum(dilations)                      # TCN receptive-field halo per side
    Rpad = _round_up(R, 8)                  # front halo (aligned)

    # Frame-axis tiling: TL output frames per grid step; the VMEM window holds
    # P >= TL + Rpad + R frames, rounded to a lane-dense multiple of 128.
    TL = _round_up(max(8, min(time_tile, _round_up(L, 8))), 8)
    n_t = pl.cdiv(L, TL)
    Lpad = n_t * TL
    P = _round_up(TL + Rpad + R, 128)

    # ---- host-side packing (waveform-sized, negligible HBM traffic) ---------
    xa = x[:, 0, :L * S].reshape(B, L, S)
    xb = x[:, 0, S:S + L * S].reshape(B, L, S)
    frames = jnp.concatenate([xa, xb], axis=-1)                  # [B, L, K]
    framesT = jnp.transpose(frames, (0, 2, 1))                   # [B, K, L]
    tot = (n_t - 1) * TL + P
    framesT_full = jnp.pad(framesT, ((0, 0), (0, 0), (Rpad, tot - Rpad - L)))
    idx = (jnp.arange(n_t, dtype=jnp.int32)[:, None] * TL
           + jnp.arange(P, dtype=jnp.int32)[None, :])            # [n_t, P]
    frames_win = jnp.take(framesT_full, idx, axis=2)             # [B, K, n_t, P]
    frames_win = jnp.transpose(frames_win, (0, 2, 1, 3))         # [B, n_t, K, P]

    # Weights: bf16 for the MXU, bias kept f32 (added on the f32 accumulator).
    enc_w = params["enc_w"][:, 0, :].astype(jnp.bfloat16)        # [C, K]
    dec_wT = jnp.transpose(params["dec_w"][:, 0, :]).astype(jnp.bfloat16)  # [K, C]
    tcn_w = jnp.stack([jnp.transpose(w, (2, 0, 1))
                       for w in params["tcn_w"]])                # [N, 3, Co, Ci]
    tcn_w = tcn_w.reshape(num_layers * 3, C, C).astype(jnp.bfloat16)
    tcn_b = jnp.stack(params["tcn_b"]).astype(jnp.float32)[:, :, None]  # [N, C, 1]

    const2 = lambda b, t: (0, 0)
    const3 = lambda b, t: (0, 0, 0)
    flops = int(2 * B * n_t * P * (2 * C * K + 3 * num_layers * C * C))
    bytes_accessed = int(4 * frames_win.size
                         + 2 * (enc_w.size + tcn_w.size + dec_wT.size)
                         + 4 * tcn_b.size + 4 * B * n_t * K * P)

    out_win = pl.pallas_call(
        _make_fused_kernel(dilations, L, TL, Rpad, P),
        out_shape=jax.ShapeDtypeStruct((B, n_t, K, P), jnp.float32),
        grid=(B, n_t),
        in_specs=[
            pl.BlockSpec((1, 1, K, P), lambda b, t: (b, t, 0, 0)),   # frame windows
            pl.BlockSpec((C, K), const2),                            # encoder W (bf16)
            pl.BlockSpec((num_layers * 3, C, C), const3),            # TCN taps (bf16)
            pl.BlockSpec((num_layers, C, 1), const3),                # TCN biases (f32)
            pl.BlockSpec((K, C), const2),                            # decoder W^T (bf16)
        ],
        out_specs=pl.BlockSpec((1, 1, K, P), lambda b, t: (b, t, 0, 0)),
        scratch_shapes=[pltpu.VMEM((C, P), jnp.bfloat16)],           # resident tile
        compiler_params=pltpu.CompilerParams(
            dimension_semantics=("parallel", "parallel"),
            vmem_limit_bytes=vmem_limit_bytes,
        ),
        cost_estimate=pl.CostEstimate(flops=flops, transcendentals=0,
                                      bytes_accessed=bytes_accessed),
    )(frames_win, enc_w, tcn_w, tcn_b, dec_wT)

    # ---- host-side overlap-add of the per-frame decoder windows (K == 2*S) --
    dec_frames = out_win[:, :, :, Rpad:Rpad + TL]                  # [B, n_t, K, TL]
    dec_frames = jnp.transpose(dec_frames, (0, 2, 1, 3)).reshape(B, K, Lpad)
    dec_frames = dec_frames[:, :, :L]                              # [B, K, L]
    T_out = (L - 1) * S + K
    half0 = jnp.transpose(dec_frames[:, :S, :], (0, 2, 1)).reshape(B, L * S)
    half1 = jnp.transpose(dec_frames[:, S:, :], (0, 2, 1)).reshape(B, L * S)
    out = jnp.zeros((B, T_out), jnp.float32)
    out = out.at[:, :L * S].add(half0)
    out = out.at[:, S:].add(half1)
    return out[:, None, :]


# ----------------------------------------------------------------------------
# Deterministic parameter init (PyTorch-style uniform(-1/sqrt(fan_in), +...))
# ----------------------------------------------------------------------------
def init_params(key, num_filters, num_layers, kernel_size):
    C, K = num_filters, kernel_size
    keys = jax.random.split(key, 2 + 2 * num_layers)

    def u(k, shape, fan_in):
        bound = 1.0 / math.sqrt(fan_in)
        return jax.random.uniform(k, shape, jnp.float32, -bound, bound)

    params = {
        "enc_w": u(keys[0], (C, 1, K), 1 * K),        # Conv1d(1, C, K)
        "dec_w": u(keys[1], (C, 1, K), 1 * K),        # ConvTranspose1d(C, 1, K)
        "tcn_w": [],
        "tcn_b": [],
    }
    for i in range(num_layers):
        params["tcn_w"].append(u(keys[2 + 2 * i], (C, C, 3), C * 3))
        params["tcn_b"].append(u(keys[3 + 2 * i], (C,), C * 3))
    return params


# ----------------------------------------------------------------------------
# Pure-JAX reference (sanity check for the Pallas path)
# ----------------------------------------------------------------------------
def reference_forward(x, params, kernel_size=16, stride=8):
    K, S = kernel_size, stride
    hp = jax.lax.Precision.HIGHEST
    dn = jax.lax.conv_dimension_numbers(x.shape, params["enc_w"].shape,
                                        ("NCH", "OIH", "NCH"))
    enc = jax.lax.conv_general_dilated(x, params["enc_w"], (S,), "VALID",
                                       dimension_numbers=dn, precision=hp)
    h = jnp.maximum(enc, 0.0)                                        # [B, C, L]
    for i, (w, b) in enumerate(zip(params["tcn_w"], params["tcn_b"])):
        d = 2 ** i
        dn2 = jax.lax.conv_dimension_numbers(h.shape, w.shape, ("NCH", "OIH", "NCH"))
        y = jax.lax.conv_general_dilated(h, w, (1,), [(d, d)], rhs_dilation=(d,),
                                         dimension_numbers=dn2, precision=hp)
        h = jnp.maximum(y + b[None, :, None], 0.0)
    B, C, L = h.shape
    dec_w = params["dec_w"][:, 0, :]
    T_out = (L - 1) * S + K
    out = jnp.zeros((B, T_out), jnp.float32)
    for l in range(L):
        out = out.at[:, l * S:l * S + K].add(
            jnp.einsum("bc,ck->bk", h[:, :, l], dec_w, precision=hp))
    return out[:, None, :]


# ----------------------------------------------------------------------------
if __name__ == "__main__":
    # Small, module-consistent shapes (original: num_filters=512, num_layers=8)
    B, T = 2, 256
    NUM_FILTERS = 64
    NUM_LAYERS = 4          # dilations 1, 2, 4, 8
    K, S = 16, 8

    key = jax.random.PRNGKey(0)
    kx, kp = jax.random.split(key)
    x = jax.random.normal(kx, (B, 1, T), dtype=jnp.float32)
    params = init_params(kp, NUM_FILTERS, NUM_LAYERS, K)

    y_ref = reference_forward(x, params, K, S)
    scale = float(jnp.max(jnp.abs(y_ref))) + 1e-6

    # Single frame-tile per batch element (whole sequence resident in VMEM).
    y1 = jax.block_until_ready(conv_tasnet_forward(x, params, K, S))
    # Multi-tile path (halo'd frame windows) -- exercises the production tiling.
    y2 = jax.block_until_ready(conv_tasnet_forward(x, params, K, S, time_tile=8))

    L = (T - K) // S + 1
    assert y1.shape == (B, 1, (L - 1) * S + K)
    for y in (y1, y2):
        err = float(jnp.max(jnp.abs(y - y_ref)))
        # bf16 matmuls with f32 accumulation vs. f32 reference.
        assert err <= 5e-2 * scale + 1e-3, f"mismatch vs reference: {err}"

    print("KERNEL_OK")
</pallas_src>

<mosaic_0001>
module attributes {stable_mosaic.version = 11 : i64} {
  func.func @kernel(%arg0: i32, %arg1: i32, %arg2: memref<1x1x16x128xf32, #tpu.memory_space<vmem>>, %arg3: memref<64x16xbf16, #tpu.memory_space<vmem>>, %arg4: memref<12x64x64xbf16, #tpu.memory_space<vmem>>, %arg5: memref<4x64x1xf32, #tpu.memory_space<vmem>>, %arg6: memref<16x64xbf16, #tpu.memory_space<vmem>>, %arg7: memref<1x1x16x128xf32, #tpu.memory_space<vmem>>, %arg8: memref<64x128xbf16, #tpu.memory_space<vmem>>) attributes {dimension_semantics = [#tpu.dimension_semantics<parallel>, #tpu.dimension_semantics<parallel>], iteration_bounds = array<i64: 2, 1>, scalar_prefetch = 0 : i64, scratch_operands = 1 : i64, tpu.core_type = #tpu.core_type<tc>, window_params = [{transform_indices = @transform_0, window_bounds = array<i64: 1, 1, 16, 128>}, {pipeline_mode = #tpu.pipeline_mode<synchronous>, transform_indices = @transform_1, window_bounds = array<i64: 64, 16>}, {pipeline_mode = #tpu.pipeline_mode<synchronous>, transform_indices = @transform_2, window_bounds = array<i64: 12, 64, 64>}, {pipeline_mode = #tpu.pipeline_mode<synchronous>, transform_indices = @transform_3, window_bounds = array<i64: 4, 64, 1>}, {pipeline_mode = #tpu.pipeline_mode<synchronous>, transform_indices = @transform_4, window_bounds = array<i64: 16, 64>}, {transform_indices = @transform_5, window_bounds = array<i64: 1, 1, 16, 128>}]} {
    %c32_i32 = arith.constant 32 : i32
    %0 = arith.muli %arg1, %c32_i32 : i32
    %c16_i32 = arith.constant 16 : i32
    %1 = arith.subi %0, %c16_i32 : i32
    %c0 = arith.constant 0 : index
    %c0_0 = arith.constant 0 : index
    %c0_1 = arith.constant 0 : index
    %c0_2 = arith.constant 0 : index
    %2 = vector.load %arg2[%c0, %c0_0, %c0_1, %c0_2] : memref<1x1x16x128xf32, #tpu.memory_space<vmem>>, vector<1x1x16x128xf32>
    %3 = vector.shape_cast %2 : vector<1x1x16x128xf32> to vector<16x128xf32>
    %4 = arith.truncf %3 : vector<16x128xf32> to vector<16x128xbf16>
    %c0_3 = arith.constant 0 : index
    %c0_4 = arith.constant 0 : index
    %5 = vector.load %arg3[%c0_3, %c0_4] : memref<64x16xbf16, #tpu.memory_space<vmem>>, vector<64x16xbf16>
    %cst = arith.constant dense<0.000000e+00> : vector<64x128xf32>
    %6 = tpu.matmul %5, %4, %cst {dimension_numbers = #tpu.dot_dimension_numbers<[1], [0], [0], [1], [0, 0, 1, 1], [], []>} : vector<64x16xbf16>, vector<16x128xbf16>, vector<64x128xf32> -> vector<64x128xf32>
    %cst_5 = arith.constant 0.000000e+00 : f32
    %7 = vector.broadcast %cst_5 : f32 to vector<64x128xf32>
    %8 = arith.maximumf %6, %7 : vector<64x128xf32>
    %9 = arith.truncf %8 : vector<64x128xf32> to vector<64x128xbf16>
    %c0_6 = arith.constant 0 : index
    %c0_7 = arith.constant 0 : index
    %10 = vector.load %arg8[%c0_6, %c0_7] : memref<64x128xbf16, #tpu.memory_space<vmem>>, vector<64x128xbf16>
    tpu.vector_store %arg8[%c0_6, %c0_7], %9 {strides = array<i32>} : memref<64x128xbf16, #tpu.memory_space<vmem>>, vector<64x128xbf16>,
    %11 = tpu.iota {dimensions = array<i32: 1>} : vector<1x128xi32>
    %12 = vector.broadcast %1 : i32 to vector<1x128xi32>
    %13 = arith.addi %12, %11 : vector<1x128xi32>
    %c0_i32 = arith.constant 0 : i32
    %14 = vector.broadcast %c0_i32 : i32 to vector<1x128xi32>
    %15 = arith.cmpi sge, %13, %14 : vector<1x128xi32>
    %c31_i32 = arith.constant 31 : i32
    %16 = vector.broadcast %c31_i32 : i32 to vector<1x128xi32>
    %17 = arith.cmpi slt, %13, %16 : vector<1x128xi32>
    %18 = arith.andi %15, %17 : vector<1x128xi1>
    %19 = arith.extui %18 : vector<1x128xi1> to vector<1x128xi32>
    %20 = arith.sitofp %19 : vector<1x128xi32> to vector<1x128xf32>
    %c0_8 = arith.constant 0 : index
    %c0_9 = arith.constant 0 : index
    %21 = vector.load %arg8[%c0_8, %c0_9] : memref<64x128xbf16, #tpu.memory_space<vmem>>, vector<64x128xbf16>
    %c0_10 = arith.constant 0 : index
    %c0_11 = arith.constant 0 : index
    %c0_12 = arith.constant 0 : index
    %22 = vector.load %arg4[%c0_10, %c0_11, %c0_12] : memref<12x64x64xbf16, #tpu.memory_space<vmem>>, vector<1x64x64xbf16>
    %23 = vector.shape_cast %22 : vector<1x64x64xbf16> to vector<64x64xbf16>
    %cst_13 = arith.constant dense<0.000000e+00> : vector<64x128xf32>
    %24 = tpu.matmul %23, %21, %cst_13 {dimension_numbers = #tpu.dot_dimension_numbers<[1], [0], [0], [1], [0, 0, 1, 1], [], []>} : vector<64x64xbf16>, vector<64x128xbf16>, vector<64x128xf32> -> vector<64x128xf32>
    %c1 = arith.constant 1 : index
    %c0_14 = arith.constant 0 : index
    %c0_15 = arith.constant 0 : index
    %25 = vector.load %arg4[%c1, %c0_14, %c0_15] : memref<12x64x64xbf16, #tpu.memory_space<vmem>>, vector<1x64x64xbf16>
    %26 = vector.shape_cast %25 : vector<1x64x64xbf16> to vector<64x64xbf16>
    %cst_16 = arith.constant dense<0.000000e+00> : vector<64x128xf32>
    %27 = tpu.matmul %26, %21, %cst_16 {dimension_numbers = #tpu.dot_dimension_numbers<[1], [0], [0], [1], [0, 0, 1, 1], [], []>} : vector<64x64xbf16>, vector<64x128xbf16>, vector<64x128xf32> -> vector<64x128xf32>
    %c2 = arith.constant 2 : index
    %c0_17 = arith.constant 0 : index
    %c0_18 = arith.constant 0 : index
    %28 = vector.load %arg4[%c2, %c0_17, %c0_18] : memref<12x64x64xbf16, #tpu.memory_space<vmem>>, vector<1x64x64xbf16>
    %29 = vector.shape_cast %28 : vector<1x64x64xbf16> to vector<64x64xbf16>
    %cst_19 = arith.constant dense<0.000000e+00> : vector<64x128xf32>
    %30 = tpu.matmul %29, %21, %cst_19 {dimension_numbers = #tpu.dot_dimension_numbers<[1], [0], [0], [1], [0, 0, 1, 1], [], []>} : vector<64x64xbf16>, vector<64x128xbf16>, vector<64x128xf32> -> vector<64x128xf32>
    %c1_i32 = arith.constant 1 : i32
    %31 = tpu.dynamic_rotate %24 by %c1_i32 dim 1 : vector<64x128xf32>, i32 -> vector<64x128xf32>
    %32 = arith.addf %31, %27 : vector<64x128xf32>
    %c127_i32 = arith.constant 127 : i32
    %33 = tpu.dynamic_rotate %30 by %c127_i32 dim 1 : vector<64x128xf32>, i32 -> vector<64x128xf32>
    %34 = arith.addf %32, %33 : vector<64x128xf32>
    %c0_20 = arith.constant 0 : index
    %c0_21 = arith.constant 0 : index
    %c0_22 = arith.constant 0 : index
    %35 = vector.load %arg5[%c0_20, %c0_21, %c0_22] : memref<4x64x1xf32, #tpu.memory_space<vmem>>, vector<1x64x1xf32>
    %36 = vector.shape_cast %35 : vector<1x64x1xf32> to vector<64x1xf32>
    %37 = vector.broadcast %36 : vector<64x1xf32> to vector<64x128xf32>
    %38 = arith.addf %34, %37 : vector<64x128xf32>
    %cst_23 = arith.constant 0.000000e+00 : f32
    %39 = vector.broadcast %cst_23 : f32 to vector<64x128xf32>
    %40 = arith.maximumf %38, %39 : vector<64x128xf32>
    %41 = vector.broadcast %20 : vector<1x128xf32> to vector<64x128xf32>
    %42 = arith.mulf %40, %41 : vector<64x128xf32>
    %43 = arith.truncf %42 : vector<64x128xf32> to vector<64x128xbf16>
    %c0_24 = arith.constant 0 : index
    %c0_25 = arith.constant 0 : index
    %44 = vector.load %arg8[%c0_24, %c0_25] : memref<64x128xbf16, #tpu.memory_space<vmem>>, vector<64x128xbf16>
    tpu.vector_store %arg8[%c0_24, %c0_25], %43 {strides = array<i32>} : memref<64x128xbf16, #tpu.memory_space<vmem>>, vector<64x128xbf16>,
    %c0_26 = arith.constant 0 : index
    %c0_27 = arith.constant 0 : index
    %45 = vector.load %arg8[%c0_26, %c0_27] : memref<64x128xbf16, #tpu.memory_space<vmem>>, vector<64x128xbf16>
    %c3 = arith.constant 3 : index
    %c0_28 = arith.constant 0 : index
    %c0_29 = arith.constant 0 : index
    %46 = vector.load %arg4[%c3, %c0_28, %c0_29] : memref<12x64x64xbf16, #tpu.memory_space<vmem>>, vector<1x64x64xbf16>
    %47 = vector.shape_cast %46 : vector<1x64x64xbf16> to vector<64x64xbf16>
    %cst_30 = arith.constant dense<0.000000e+00> : vector<64x128xf32>
    %48 = tpu.matmul %47, %45, %cst_30 {dimension_numbers = #tpu.dot_dimension_numbers<[1], [0], [0], [1], [0, 0, 1, 1], [], []>} : vector<64x64xbf16>, vector<64x128xbf16>, vector<64x128xf32> -> vector<64x128xf32>
    %c4 = arith.constant 4 : index
    %c0_31 = arith.constant 0 : index
    %c0_32 = arith.constant 0 : index
    %49 = vector.load %arg4[%c4, %c0_31, %c0_32] : memref<12x64x64xbf16, #tpu.memory_space<vmem>>, vector<1x64x64xbf16>
    %50 = vector.shape_cast %49 : vector<1x64x64xbf16> to vector<64x64xbf16>
    %cst_33 = arith.constant dense<0.000000e+00> : vector<64x128xf32>
    %51 = tpu.matmul %50, %45, %cst_33 {dimension_numbers = #tpu.dot_dimension_numbers<[1], [0], [0], [1], [0, 0, 1, 1], [], []>} : vector<64x64xbf16>, vector<64x128xbf16>, vector<64x128xf32> -> vector<64x128xf32>
    %c5 = arith.constant 5 : index
    %c0_34 = arith.constant 0 : index
    %c0_35 = arith.constant 0 : index
    %52 = vector.load %arg4[%c5, %c0_34, %c0_35] : memref<12x64x64xbf16, #tpu.memory_space<vmem>>, vector<1x64x64xbf16>
    %53 = vector.shape_cast %52 : vector<1x64x64xbf16> to vector<64x64xbf16>
    %cst_36 = arith.constant dense<0.000000e+00> : vector<64x128xf32>
    %54 = tpu.matmul %53, %45, %cst_36 {dimension_numbers = #tpu.dot_dimension_numbers<[1], [0], [0], [1], [0, 0, 1, 1], [], []>} : vector<64x64xbf16>, vector<64x128xbf16>, vector<64x128xf32> -> vector<64x128xf32>
    %c2_i32 = arith.constant 2 : i32
    %55 = tpu.dynamic_rotate %48 by %c2_i32 dim 1 : vector<64x128xf32>, i32 -> vector<64x128xf32>
    %56 = arith.addf %55, %51 : vector<64x128xf32>
    %c126_i32 = arith.constant 126 : i32
    %57 = tpu.dynamic_rotate %54 by %c126_i32 dim 1 : vector<64x128xf32>, i32 -> vector<64x128xf32>
    %58 = arith.addf %56, %57 : vector<64x128xf32>
    %c1_37 = arith.constant 1 : index
    %c0_38 = arith.constant 0 : index
    %c0_39 = arith.constant 0 : index
    %59 = vector.load %arg5[%c1_37, %c0_38, %c0_39] : memref<4x64x1xf32, #tpu.memory_space<vmem>>, vector<1x64x1xf32>
    %60 = vector.shape_cast %59 : vector<1x64x1xf32> to vector<64x1xf32>
    %61 = vector.broadcast %60 : vector<64x1xf32> to vector<64x128xf32>
    %62 = arith.addf %58, %61 : vector<64x128xf32>
    %cst_40 = arith.constant 0.000000e+00 : f32
    %63 = vector.broadcast %cst_40 : f32 to vector<64x128xf32>
    %64 = arith.maximumf %62, %63 : vector<64x128xf32>
    %65 = vector.broadcast %20 : vector<1x128xf32> to vector<64x128xf32>
    %66 = arith.mulf %64, %65 : vector<64x128xf32>
    %67 = arith.truncf %66 : vector<64x128xf32> to vector<64x128xbf16>
    %c0_41 = arith.constant 0 : index
    %c0_42 = arith.constant 0 : index
    %68 = vector.load %arg8[%c0_41, %c0_42] : memref<64x128xbf16, #tpu.memory_space<vmem>>, vector<64x128xbf16>
    tpu.vector_store %arg8[%c0_41, %c0_42], %67 {strides = array<i32>} : memref<64x128xbf16, #tpu.memory_space<vmem>>, vector<64x128xbf16>,
    %c0_43 = arith.constant 0 : index
    %c0_44 = arith.constant 0 : index
    %69 = vector.load %arg8[%c0_43, %c0_44] : memref<64x128xbf16, #tpu.memory_space<vmem>>, vector<64x128xbf16>
    %c6 = arith.constant 6 : index
    %c0_45 = arith.constant 0 : index
    %c0_46 = arith.constant 0 : index
    %70 = vector.load %arg4[%c6, %c0_45, %c0_46] : memref<12x64x64xbf16, #tpu.memory_space<vmem>>, vector<1x64x64xbf16>
    %71 = vector.shape_cast %70 : vector<1x64x64xbf16> to vector<64x64xbf16>
    %cst_47 = arith.constant dense<0.000000e+00> : vector<64x128xf32>
    %72 = tpu.matmul %71, %69, %cst_47 {dimension_numbers = #tpu.dot_dimension_numbers<[1], [0], [0], [1], [0, 0, 1, 1], [], []>} : vector<64x64xbf16>, vector<64x128xbf16>, vector<64x128xf32> -> vector<64x128xf32>
    %c7 = arith.constant 7 : index
    %c0_48 = arith.constant 0 : index
    %c0_49 = arith.constant 0 : index
    %73 = vector.load %arg4[%c7, %c0_48, %c0_49] : memref<12x64x64xbf16, #tpu.memory_space<vmem>>, vector<1x64x64xbf16>
    %74 = vector.shape_cast %73 : vector<1x64x64xbf16> to vector<64x64xbf16>
    %cst_50 = arith.constant dense<0.000000e+00> : vector<64x128xf32>
    %75 = tpu.matmul %74, %69, %cst_50 {dimension_numbers = #tpu.dot_dimension_numbers<[1], [0], [0], [1], [0, 0, 1, 1], [], []>} : vector<64x64xbf16>, vector<64x128xbf16>, vector<64x128xf32> -> vector<64x128xf32>
    %c8 = arith.constant 8 : index
    %c0_51 = arith.constant 0 : index
    %c0_52 = arith.constant 0 : index
    %76 = vector.load %arg4[%c8, %c0_51, %c0_52] : memref<12x64x64xbf16, #tpu.memory_space<vmem>>, vector<1x64x64xbf16>
    %77 = vector.shape_cast %76 : vector<1x64x64xbf16> to vector<64x64xbf16>
    %cst_53 = arith.constant dense<0.000000e+00> : vector<64x128xf32>
    %78 = tpu.matmul %77, %69, %cst_53 {dimension_numbers = #tpu.dot_dimension_numbers<[1], [0], [0], [1], [0, 0, 1, 1], [], []>} : vector<64x64xbf16>, vector<64x128xbf16>, vector<64x128xf32> -> vector<64x128xf32>
    %c4_i32 = arith.constant 4 : i32
    %79 = tpu.dynamic_rotate %72 by %c4_i32 dim 1 : vector<64x128xf32>, i32 -> vector<64x128xf32>
    %80 = arith.addf %79, %75 : vector<64x128xf32>
    %c124_i32 = arith.constant 124 : i32
    %81 = tpu.dynamic_rotate %78 by %c124_i32 dim 1 : vector<64x128xf32>, i32 -> vector<64x128xf32>
    %82 = arith.addf %80, %81 : vector<64x128xf32>
    %c2_54 = arith.constant 2 : index
    %c0_55 = arith.constant 0 : index
    %c0_56 = arith.constant 0 : index
    %83 = vector.load %arg5[%c2_54, %c0_55, %c0_56] : memref<4x64x1xf32, #tpu.memory_space<vmem>>, vector<1x64x1xf32>
    %84 = vector.shape_cast %83 : vector<1x64x1xf32> to vector<64x1xf32>
    %85 = vector.broadcast %84 : vector<64x1xf32> to vector<64x128xf32>
    %86 = arith.addf %82, %85 : vector<64x128xf32>
    %cst_57 = arith.constant 0.000000e+00 : f32
    %87 = vector.broadcast %cst_57 : f32 to vector<64x128xf32>
    %88 = arith.maximumf %86, %87 : vector<64x128xf32>
    %89 = vector.broadcast %20 : vector<1x128xf32> to vector<64x128xf32>
    %90 = arith.mulf %88, %89 : vector<64x128xf32>
    %91 = arith.truncf %90 : vector<64x128xf32> to vector<64x128xbf16>
    %c0_58 = arith.constant 0 : index
    %c0_59 = arith.constant 0 : index
    %92 = vector.load %arg8[%c0_58, %c0_59] : memref<64x128xbf16, #tpu.memory_space<vmem>>, vector<64x128xbf16>
    tpu.vector_store %arg8[%c0_58, %c0_59], %91 {strides = array<i32>} : memref<64x128xbf16, #tpu.memory_space<vmem>>, vector<64x128xbf16>,
    %c0_60 = arith.constant 0 : index
    %c0_61 = arith.constant 0 : index
    %93 = vector.load %arg8[%c0_60, %c0_61] : memref<64x128xbf16, #tpu.memory_space<vmem>>, vector<64x128xbf16>
    %c9 = arith.constant 9 : index
    %c0_62 = arith.constant 0 : index
    %c0_63 = arith.constant 0 : index
    %94 = vector.load %arg4[%c9, %c0_62, %c0_63] : memref<12x64x64xbf16, #tpu.memory_space<vmem>>, vector<1x64x64xbf16>
    %95 = vector.shape_cast %94 : vector<1x64x64xbf16> to vector<64x64xbf16>
    %cst_64 = arith.constant dense<0.000000e+00> : vector<64x128xf32>
    %96 = tpu.matmul %95, %93, %cst_64 {dimension_numbers = #tpu.dot_dimension_numbers<[1], [0], [0], [1], [0, 0, 1, 1], [], []>} : vector<64x64xbf16>, vector<64x128xbf16>, vector<64x128xf32> -> vector<64x128xf32>
    %c10 = arith.constant 10 : index
    %c0_65 = arith.constant 0 : index
    %c0_66 = arith.constant 0 : index
    %97 = vector.load %arg4[%c10, %c0_65, %c0_66] : memref<12x64x64xbf16, #tpu.memory_space<vmem>>, vector<1x64x64xbf16>
    %98 = vector.shape_cast %97 : vector<1x64x64xbf16> to vector<64x64xbf16>
    %cst_67 = arith.constant dense<0.000000e+00> : vector<64x128xf32>
    %99 = tpu.matmul %98, %93, %cst_67 {dimension_numbers = #tpu.dot_dimension_numbers<[1], [0], [0], [1], [0, 0, 1, 1], [], []>} : vector<64x64xbf16>, vector<64x128xbf16>, vector<64x128xf32> -> vector<64x128xf32>
    %c11 = arith.constant 11 : index
    %c0_68 = arith.constant 0 : index
    %c0_69 = arith.constant 0 : index
    %100 = vector.load %arg4[%c11, %c0_68, %c0_69] : memref<12x64x64xbf16, #tpu.memory_space<vmem>>, vector<1x64x64xbf16>
    %101 = vector.shape_cast %100 : vector<1x64x64xbf16> to vector<64x64xbf16>
    %cst_70 = arith.constant dense<0.000000e+00> : vector<64x128xf32>
    %102 = tpu.matmul %101, %93, %cst_70 {dimension_numbers = #tpu.dot_dimension_numbers<[1], [0], [0], [1], [0, 0, 1, 1], [], []>} : vector<64x64xbf16>, vector<64x128xbf16>, vector<64x128xf32> -> vector<64x128xf32>
    %c8_i32 = arith.constant 8 : i32
    %103 = tpu.dynamic_rotate %96 by %c8_i32 dim 1 : vector<64x128xf32>, i32 -> vector<64x128xf32>
    %104 = arith.addf %103, %99 : vector<64x128xf32>
    %c120_i32 = arith.constant 120 : i32
    %105 = tpu.dynamic_rotate %102 by %c120_i32 dim 1 : vector<64x128xf32>, i32 -> vector<64x128xf32>
    %106 = arith.addf %104, %105 : vector<64x128xf32>
    %c3_71 = arith.constant 3 : index
    %c0_72 = arith.constant 0 : index
    %c0_73 = arith.constant 0 : index
    %107 = vector.load %arg5[%c3_71, %c0_72, %c0_73] : memref<4x64x1xf32, #tpu.memory_space<vmem>>, vector<1x64x1xf32>
    %108 = vector.shape_cast %107 : vector<1x64x1xf32> to vector<64x1xf32>
    %109 = vector.broadcast %108 : vector<64x1xf32> to vector<64x128xf32>
    %110 = arith.addf %106, %109 : vector<64x128xf32>
    %cst_74 = arith.constant 0.000000e+00 : f32
    %111 = vector.broadcast %cst_74 : f32 to vector<64x128xf32>
    %112 = arith.maximumf %110, %111 : vector<64x128xf32>
    %c0_75 = arith.constant 0 : index
    %c0_76 = arith.constant 0 : index
    %113 = vector.load %arg6[%c0_75, %c0_76] : memref<16x64xbf16, #tpu.memory_space<vmem>>, vector<16x64xbf16>
    %114 = arith.truncf %112 : vector<64x128xf32> to vector<64x128xbf16>
    %cst_77 = arith.constant dense<0.000000e+00> : vector<16x128xf32>
    %115 = tpu.matmul %113, %114, %cst_77 {dimension_numbers = #tpu.dot_dimension_numbers<[1], [0], [0], [1], [0, 0, 1, 1], [], []>} : vector<16x64xbf16>, vector<64x128xbf16>, vector<16x128xf32> -> vector<16x128xf32>
    %c0_78 = arith.constant 0 : index
    %c0_79 = arith.constant 0 : index
    %c0_80 = arith.constant 0 : index
    %c0_81 = arith.constant 0 : index
    %116 = vector.load %arg7[%c0_78, %c0_79, %c0_80, %c0_81] : memref<1x1x16x128xf32, #tpu.memory_space<vmem>>, vector<1x1x16x128xf32>
    %117 = vector.shape_cast %116 : vector<1x1x16x128xf32> to vector<16x128xf32>
    %118 = vector.shape_cast %115 : vector<16x128xf32> to vector<1x1x16x128xf32>
    tpu.vector_store %arg7[%c0_78, %c0_79, %c0_80, %c0_81], %118 {strides = array<i32>} : memref<1x1x16x128xf32, #tpu.memory_space<vmem>>, vector<1x1x16x128xf32>,
    return
  }
  func.func @transform_0(%arg0: i32, %arg1: i32) -> (i32, i32, i32, i32) {
    %c0_i32 = arith.constant 0 : i32
    %c0_i32_0 = arith.constant 0 : i32
    %c0_i32_1 = arith.constant 0 : i32
    return %arg0, %arg1, %c0_i32, %c0_i32_0 : i32, i32, i32, i32
  }
  func.func @transform_1(%arg0: i32, %arg1: i32) -> (i32, i32) {
    %c0_i32 = arith.constant 0 : i32
    %c0_i32_0 = arith.constant 0 : i32
    %c0_i32_1 = arith.constant 0 : i32
    return %c0_i32, %c0_i32_0 : i32, i32
  }
  func.func @transform_2(%arg0: i32, %arg1: i32) -> (i32, i32, i32) {
    %c0_i32 = arith.constant 0 : i32
    %c0_i32_0 = arith.constant 0 : i32
    %c0_i32_1 = arith.constant 0 : i32
    %c0_i32_2 = arith.constant 0 : i32
    return %c0_i32, %c0_i32_0, %c0_i32_1 : i32, i32, i32
  }
  func.func @transform_3(%arg0: i32, %arg1: i32) -> (i32, i32, i32) {
    %c0_i32 = arith.constant 0 : i32
    %c0_i32_0 = arith.constant 0 : i32
    %c0_i32_1 = arith.constant 0 : i32
    %c0_i32_2 = arith.constant 0 : i32
    return %c0_i32, %c0_i32_0, %c0_i32_1 : i32, i32, i32
  }
  func.func @transform_4(%arg0: i32, %arg1: i32) -> (i32, i32) {
    %c0_i32 = arith.constant 0 : i32
    %c0_i32_0 = arith.constant 0 : i32
    %c0_i32_1 = arith.constant 0 : i32
    return %c0_i32, %c0_i32_0 : i32, i32
  }
  func.func @transform_5(%arg0: i32, %arg1: i32) -> (i32, i32, i32, i32) {
    %c0_i32 = arith.constant 0 : i32
    %c0_i32_0 = arith.constant 0 : i32
    %c0_i32_1 = arith.constant 0 : i32
    return %arg0, %arg1, %c0_i32, %c0_i32_0 : i32, i32, i32, i32
  }
}

</mosaic_0001>

<llo_original>
// kernel: tpu_custom_call.1
$region0: #{tpu_custom_call.1}
  #allocation0 [shape = 'u32[]', space=smem, size = 0x4, offset = 0x4, fixed_abs, tag = 'smem constant byte address 0x4 - core index']
  #allocation1 [shape = 'u32[72,128]{1,0:T(1,128)}', space=vmem, size = 0x9000, scoped, tag = 'internal scratch']
  #allocation2 [shape = 'bf16[64,128]{1,0:T(8,128)(2,1)}', space=vmem, size = 0x4000, scoped, tag = 'scratch operand']
  %s0 = inlined_call_operand.vmem [shape: f32[2,1,16,128], index: 0, kind: input, shape index: {}]
  %s1 = inlined_call_operand.vmem [shape: bf16[64,16], index: 1, kind: input, shape index: {}]
  %s2 = inlined_call_operand.hbm [shape: bf16[12,64,64], index: 2, kind: input, shape index: {}]
  %s3 = inlined_call_operand.vmem [shape: f32[4,64,1], index: 3, kind: input, shape index: {}]
  %s4 = inlined_call_operand.vmem [shape: bf16[16,64], index: 4, kind: input, shape index: {}]
  %s5 = inlined_call_operand.hbm [shape: f32[2,1,16,128], index: 5, kind: output, shape index: {}]
  %s6 = sld [smem:[#allocation0]]
  $region57: #{tpu_custom_call.1} parent=0
    _
  %s8 = ssub.s32 1, %s6
  %s9 = scalar_select 0, %s8, %s6
  $region1: #{tpu_custom_call.1} parent=0
    #allocation3 [shape = 'u8[196608]{0}', space=vmem, size = 0x30000, scoped, tag = 'input window, operand 2, single buffered']
    #allocation4 [shape = 's32[2]{0}', space=sflag, size = 0x8, scoped, tag = 'scoped memory for tpu_custom_call.1']
    #allocation5 [shape = 's32[2]{0}', space=sflag, size = 0x8, scoped, tag = 'scoped memory for tpu_custom_call.1']
    #allocation6 [shape = 'u8[16384]{0}', space=vmem, size = 0x4000, scoped, tag = 'output window, operand 0']
    %10 = vsyncpa [#allocation4], 0
    %11 = vsyncpa [#allocation5], 0
    %s12 = scalar_lea.sflag [#allocation5], 1
    %13 = vsyncpa %s12, 0
    loop: start=0, step=1, limit=4
    $region2: #{tpu_custom_call.1} parent=1 // loop_pre_header
      _
    $region3: #{tpu_custom_call.1} parent=1 // loop_header
      %s15 = sphi 0, %s19
      %p16 = scmp.ge.s32.totalorder %s15, 4
      %s22 = sphi 0, %s34
      %s23 = sphi 0, %s30
      %s24 = sphi 0, %s22
      %s25 = sphi 0, %s23
      %s26 = sphi 0, %s24
      %s27 = sphi 0, %s25
      %s39 = sphi 0, %s41
      %s42 = sphi 0, %s39
      %s43 = sphi 0, %s42
      %s59 = sphi 0, %s43
      %s63 = sphi 0, %s63
      %s65 = sphi 0, %s63
      %s66 = sphi 0, %s65
      %s80 = sphi 0, %s66
      %s84 = sphi 0, %s84
      %s86 = sphi 0, %s84
      %s87 = sphi 0, %s86
      %s101 = sphi 0, %s87
      %s105 = sphi 0, %s105
      %s107 = sphi 0, %s105
      %s108 = sphi 0, %s107
      %s122 = sphi 0, %s108
      %s126 = sphi 0, %s126
      %s128 = sphi 0, %s126
      %s129 = sphi 0, %s128
      %s143 = sphi 0, %s129
      %s151 = sphi 0, %s153
      %s154 = sphi 0, %s151
      %s155 = sphi 0, %s154
      %s171 = sphi 0, %s155
    $region4: #{tpu_custom_call.1} parent=1 // loop_header_branch
      %18 = sbr.rel (%p16) target = $region8
    $region5: #{tpu_custom_call.1} parent=1 // loop_body
      %s20 = ssub.s32 %s15, 1
      %s21 = ssub.s32 %s15, 2
      %s28 = sadd.s32 1, %s23
      %p29 = scmp.ge.s32.totalorder %s28, 1
      %s30 = scalar_select %p29, 0, %s28
      %s31 = sadd.s32 1, %s22
      %s32 = scalar_select %p29, %s31, %s22
      %p33 = scmp.ge.s32.totalorder %s32, 2
      %s34 = scalar_select %p33, 0, %s32
      %s35 = ssub.s32 %s22, %s34
      %s36 = ssub.s32 %s23, %s30
      %s37 = sor.u32 %s35, %s36
      %p38 = scmp.eq.s32.totalorder %s37, 0
      %s40 = sadd.s32 %s39, 1
      %s41 = scalar_select %p38, %s39, %s40
      %p44 = pneg %p38
      %p45 = scmp.eq.s32.totalorder %s15, 1
      %p46 = por %p44, %p45
      %p47 = scmp.ne.s32.totalorder %s39, %s42
      %p48 = scmp.eq.s32.totalorder %s15, 0
      %p49 = por %p47, %p48
      %p50 = scmp.ne.s32.totalorder %s39, %s42
      %p51 = scmp.eq.s32.totalorder %s20, 1
      %p52 = por %p50, %p51
      %p53 = scmp.ne.s32.totalorder %s42, %s43
      %p54 = scmp.eq.s32.totalorder %s20, 0
      %p55 = por %p53, %p54
      %p56 = scmp.ne.s32.totalorder %s42, %s43
      %p57 = scmp.eq.s32.totalorder %s21, 1
      %p58 = por %p56, %p57
      %p60 = scmp.ne.s32.totalorder %s43, %s59
      %p61 = scmp.eq.s32.totalorder %s21, 0
      %p62 = por %p60, %p61
      %s64 = sadd.s32 %s63, 1
      %p67 = scmp.eq.s32.totalorder %s15, 1
      %p68 = scmp.ne.s32.totalorder %s63, %s65
      %p69 = scmp.eq.s32.totalorder %s15, 0
      %p70 = por %p68, %p69
      %p71 = scmp.ne.s32.totalorder %s63, %s65
      %p72 = scmp.eq.s32.totalorder %s20, 1
      %p73 = por %p71, %p72
      %p74 = scmp.ne.s32.totalorder %s65, %s66
      %p75 = scmp.eq.s32.totalorder %s20, 0
      %p76 = por %p74, %p75
      %p77 = scmp.ne.s32.totalorder %s65, %s66
      %p78 = scmp.eq.s32.totalorder %s21, 1
      %p79 = por %p77, %p78
      %p81 = scmp.ne.s32.totalorder %s66, %s80
      %p82 = scmp.eq.s32.totalorder %s21, 0
      %p83 = por %p81, %p82
      %s85 = sadd.s32 %s84, 1
      %p88 = scmp.eq.s32.totalorder %s15, 1
      %p89 = scmp.ne.s32.totalorder %s84, %s86
      %p90 = scmp.eq.s32.totalorder %s15, 0
      %p91 = por %p89, %p90
      %p92 = scmp.ne.s32.totalorder %s84, %s86
      %p93 = scmp.eq.s32.totalorder %s20, 1
      %p94 = por %p92, %p93
      %p95 = scmp.ne.s32.totalorder %s86, %s87
      %p96 = scmp.eq.s32.totalorder %s20, 0
      %p97 = por %p95, %p96
      %p98 = scmp.ne.s32.totalorder %s86, %s87
      %p99 = scmp.eq.s32.totalorder %s21, 1
      %p100 = por %p98, %p99
      %p102 = scmp.ne.s32.totalorder %s87, %s101
      %p103 = scmp.eq.s32.totalorder %s21, 0
      %p104 = por %p102, %p103
      %s106 = sadd.s32 %s105, 1
      %p109 = scmp.eq.s32.totalorder %s15, 1
      %p110 = scmp.ne.s32.totalorder %s105, %s107
      %p111 = scmp.eq.s32.totalorder %s15, 0
      %p112 = por %p110, %p111
      %p113 = scmp.ne.s32.totalorder %s105, %s107
      %p114 = scmp.eq.s32.totalorder %s20, 1
      %p115 = por %p113, %p114
      %p116 = scmp.ne.s32.totalorder %s107, %s108
      %p117 = scmp.eq.s32.totalorder %s20, 0
      %p118 = por %p116, %p117
      %p119 = scmp.ne.s32.totalorder %s107, %s108
      %p120 = scmp.eq.s32.totalorder %s21, 1
      %p121 = por %p119, %p120
      %p123 = scmp.ne.s32.totalorder %s108, %s122
      %p124 = scmp.eq.s32.totalorder %s21, 0
      %p125 = por %p123, %p124
      %s127 = sadd.s32 %s126, 1
      %p130 = scmp.eq.s32.totalorder %s15, 1
      %p131 = scmp.ne.s32.totalorder %s126, %s128
      %p132 = scmp.eq.s32.totalorder %s15, 0
      %p133 = por %p131, %p132
      %p134 = scmp.ne.s32.totalorder %s126, %s128
      %p135 = scmp.eq.s32.totalorder %s20, 1
      %p136 = por %p134, %p135
      %p137 = scmp.ne.s32.totalorder %s128, %s129
      %p138 = scmp.eq.s32.totalorder %s20, 0
      %p139 = por %p137, %p138
      %p140 = scmp.ne.s32.totalorder %s128, %s129
      %p141 = scmp.eq.s32.totalorder %s21, 1
      %p142 = por %p140, %p141
      %p144 = scmp.ne.s32.totalorder %s129, %s143
      %p145 = scmp.eq.s32.totalorder %s21, 0
      %p146 = por %p144, %p145
      %s147 = ssub.s32 %s22, %s34
      %s148 = ssub.s32 %s23, %s30
      %s149 = sor.u32 %s147, %s148
      %p150 = scmp.eq.s32.totalorder %s149, 0
      %s152 = sadd.s32 %s151, 1
      %s153 = scalar_select %p150, %s151, %s152
      %p156 = pneg %p150
      %p157 = scmp.eq.s32.totalorder %s15, 1
      %p158 = por %p156, %p157
      %p159 = scmp.ne.s32.totalorder %s151, %s154
      %p160 = scmp.eq.s32.totalorder %s15, 0
      %p161 = por %p159, %p160
      %p162 = scmp.ne.s32.totalorder %s151, %s154
      %p163 = scmp.eq.s32.totalorder %s20, 1
      %p164 = por %p162, %p163
      %p165 = scmp.ne.s32.totalorder %s154, %s155
      %p166 = scmp.eq.s32.totalorder %s20, 0
      %p167 = por %p165, %p166
      %p168 = scmp.ne.s32.totalorder %s154, %s155
      %p169 = scmp.eq.s32.totalorder %s21, 1
      %p170 = por %p168, %p169
      %p172 = scmp.ne.s32.totalorder %s155, %s171
      %p173 = scmp.eq.s32.totalorder %s21, 0
      %p174 = por %p172, %p173
      %p175 = scmp.le.s32.totalorder 1, %s15
      %p176 = scmp.lt.s32.totalorder %s15, 3
      %p177 = pnand %p175, %p176
      %p178 = pneg %p177
      // Predicated region
      $region9: #{tpu_custom_call.1} parent=5 // pred_check
        _
      $region10: #{tpu_custom_call.1} parent=5 // pred_check_branch
        %180 = sbr.rel (%p177) target = $region12
      $region11: #{tpu_custom_call.1} parent=5 // pred_region
        %s181 = ssub.s32 %s15, 1
        // Predicated region
        $region13: #{tpu_custom_call.1} parent=11 // pred_check
          %p182 = pneg %p76
        $region14: #{tpu_custom_call.1} parent=11 // pred_check_branch
          %184 = sbr.rel (%p182) target = $region16
        $region15: #{tpu_custom_call.1} parent=11 // pred_region
          _
        $region16: #{tpu_custom_call.1} parent=11 // pred_fallthru
          _
        // Predicated region
        $region17: #{tpu_custom_call.1} parent=11 // pred_check
          %p185 = pneg %p97
        $region18: #{tpu_custom_call.1} parent=11 // pred_check_branch
          %187 = sbr.rel (%p185) target = $region20
        $region19: #{tpu_custom_call.1} parent=11 // pred_region
          %189 = vsyncadd [#allocation4], 0
          %s190 = sshll.u32 %s2, 4
          %s191 = int_to_ptr.hbm [resolvable:$true] %s190
          %s192 = sshll.u32 [#allocation3], 4
          %s193 = int_to_ptr.vmem [resolvable:$true] %s192
          %198 = dma.hbm_to_vmem [thread:$0]  %s191, 6144, %s193, [#allocation4], 64, 64, 4
        $region20: #{tpu_custom_call.1} parent=11 // pred_fallthru
          _
        // Predicated region
        $region21: #{tpu_custom_call.1} parent=11 // pred_check
          %p199 = pneg %p118
        $region22: #{tpu_custom_call.1} parent=11 // pred_check_branch
          %201 = sbr.rel (%p199) target = $region24
        $region23: #{tpu_custom_call.1} parent=11 // pred_region
          _
        $region24: #{tpu_custom_call.1} parent=11 // pred_fallthru
          _
        // Predicated region
        $region25: #{tpu_custom_call.1} parent=11 // pred_check
          %p202 = pneg %p139
        $region26: #{tpu_custom_call.1} parent=11 // pred_check_branch
          %204 = sbr.rel (%p202) target = $region28
        $region27: #{tpu_custom_call.1} parent=11 // pred_region
          _
        $region28: #{tpu_custom_call.1} parent=11 // pred_fallthru
          _
      $region12: #{tpu_custom_call.1} parent=5 // pred_fallthru
        _
      %p205 = scmp.lt.s32.totalorder %s15, 2
      // Predicated region
      $region29: #{tpu_custom_call.1} parent=5 // pred_check
        %p206 = pneg %p205
      $region30: #{tpu_custom_call.1} parent=5 // pred_check_branch
        %208 = sbr.rel (%p206) target = $region32
      $region31: #{tpu_custom_call.1} parent=5 // pred_region
        // Predicated region
        $region33: #{tpu_custom_call.1} parent=31 // pred_check
          %p209 = pneg %p49
        $region34: #{tpu_custom_call.1} parent=31 // pred_check_branch
          %211 = sbr.rel (%p209) target = $region36
        $region35: #{tpu_custom_call.1} parent=31 // pred_region
          %p212 = scmp.lt.s32.totalorder %s22, 1
          %s213 = scalar_select %p212, %s22, 1
          %p214 = scmp.lt.s32.totalorder %s23, 0
          %s215 = scalar_select %p214, %s23, 0
          %s216 = smul.addr %s215, 2
          %s217 = smul.addr %s213, 2
          %s218 = sadd.s32 %s216, %s217
          %s219 = smul.addr %s218, 8
          %s220 = scalar_lea.vmem %s0, %s219
        $region36: #{tpu_custom_call.1} parent=31 // pred_fallthru
          _
      $region32: #{tpu_custom_call.1} parent=5 // pred_fallthru
        _
      %p221 = scmp.le.s32.totalorder 1, %s15
      %p222 = scmp.lt.s32.totalorder %s15, 3
      %p223 = pnand %p221, %p222
      %p224 = pneg %p223
      // Predicated region
      $region37: #{tpu_custom_call.1} parent=5 // pred_check
        _
      $region38: #{tpu_custom_call.1} parent=5 // pred_check_branch
        %226 = sbr.rel (%p223) target = $region40
      $region39: #{tpu_custom_call.1} parent=5 // pred_region
        %s227 = ssub.s32 %s15, 1
        // Predicated region
        $region41: #{tpu_custom_call.1} parent=39 // pred_check
          %p228 = pneg %p97
        $region42: #{tpu_custom_call.1} parent=39 // pred_check_branch
          %230 = sbr.rel (%p228) target = $region44
        $region43: #{tpu_custom_call.1} parent=39 // pred_region
          %232 = dma.done [#allocation4], 6144
        $region44: #{tpu_custom_call.1} parent=39 // pred_fallthru
          _
        %p233 = scmp.lt.s32.totalorder %s24, 1
        %s234 = scalar_select %p233, %s24, 1
        %p235 = scmp.lt.s32.totalorder %s25, 0
        %s236 = scalar_select %p235, %s25, 0
        %s237 = smul.addr %s236, 2
        %s238 = smul.addr %s234, 2
        %s239 = sadd.s32 %s237, %s238
        %s240 = smul.addr %s239, 8
        %s241 = scalar_lea.vmem %s0, %s240
        %p242 = pneg %p55
        %p243 = pneg %p52
        %p244 = pneg %p76
        %p245 = pneg %p73
        %p246 = pneg %p97
        %p247 = pneg %p94
        %p248 = pneg %p118
        %p249 = pneg %p115
        %p250 = pneg %p139
        %p251 = pneg %p136
        %p252 = pneg %p167
        %p253 = pneg %p164
        %s254 = sand.u32 %s154, 1
        %s255 = scalar_lea.sflag [#allocation5], %s254
        %s256 = sand.u32 %s154, 1
        %s257 = smul.addr %s256, 16
        %s258 = scalar_lea.vmem [#allocation6], %s257
        %p259 = scmp.lt.s32.totalorder %s24, 1
        %s260 = scalar_select %p259, %s24, 1
        %p261 = scmp.lt.s32.totalorder %s25, 0
        %s262 = scalar_select %p261, %s25, 0
        %s263 = smul.addr %s262, 2
        %s264 = smul.addr %s260, 2
        %s265 = sadd.s32 %s263, %s264
        %s266 = smul.addr %s265, 8
        %s267 = scalar_lea.vmem %s0, %s266
        %s269 = smul.u32 %s25, 32
        %s270 = ssub.s32 %s269, 16
        %v271 = vld [vmem:[%s267] sm:$0xff]
        %v272 = vld [vmem:[%s267 + $0x8] sm:$0xff]
        %v273 = vpack.c.bf16 %v272, %v271
        %v274 = vld [vmem:[%s1] sm:$0xf]
        %v275 = vld [vmem:[%s1 + $0x4] sm:$0xf]
        %v276 = vld [vmem:[%s1 + $0x8] sm:$0xf]
        %v277 = vld [vmem:[%s1 + $0xc] sm:$0xf]
        %v278 = vld [vmem:[%s1 + $0x10] sm:$0xf]
        %v279 = vld [vmem:[%s1 + $0x14] sm:$0xf]
        %v280 = vld [vmem:[%s1 + $0x18] sm:$0xf]
        %v281 = vld [vmem:[%s1 + $0x1c] sm:$0xf]
        %v290 = vunpack.c.l.b16 %v274
        %v291 = vunpack.c.l.b16 %v275
        %v292 = vunpack.c.l.b16 %v276
        %v293 = vunpack.c.l.b16 %v277
        %v294 = vunpack.c.l.b16 %v278
        %v295 = vunpack.c.l.b16 %v279
        %v296 = vunpack.c.l.b16 %v280
        %v297 = vunpack.c.l.b16 %v281
        %v298 = vpack.c.b16 %v291, %v290
        %v299 = vpack.c.b16 %v293, %v292
        %v300 = vpack.c.b16 %v295, %v294
        %v301 = vpack.c.b16 %v297, %v296
        %vm302 = vcmask 130048
        %v304 = vsel %vm302, %v298, 0
        %v307 = vsel %vm302, %v299, 0
        %v310 = vsel %vm302, %v300, 0
        %v313 = vsel %vm302, %v301, 0
        %315 = vmatpush.bf16.msra.mxu0 0
        %316 = vmatpush.bf16.msra.mxu0 0
        %317 = vmatpush.bf16.msra.mxu0 0
        %318 = vmatpush.bf16.msra.mxu0 0
        %319 = vmatpush.bf16.msra.mxu0 0
        %320 = vmatpush.bf16.msra.mxu0 0
        %321 = vmatpush.bf16.msra.mxu0 0
        %322 = vmatpush.bf16.msra.mxu0 %v273
        %323 = vmatmul.bf16.gmra.mxu0 %v304
        %v324 = vpop.f32.mrf.mxu0
        %v325 = vadd.f32 0.0, %v324
        %v326 = vpop.f32.mrf.mxu0
        %v327 = vadd.f32 0.0, %v326
        %328 = vmatmul.bf16.gmra.mxu0 %v307
        %v329 = vpop.f32.mrf.mxu0
        %v330 = vadd.f32 0.0, %v329
        %v331 = vpop.f32.mrf.mxu0
        %v332 = vadd.f32 0.0, %v331
        %333 = vmatmul.bf16.gmra.mxu0 %v310
        %v334 = vpop.f32.mrf.mxu0
        %v335 = vadd.f32 0.0, %v334
        %v336 = vpop.f32.mrf.mxu0
        %v337 = vadd.f32 0.0, %v336
        %338 = vmatmul.bf16.gmra.mxu0 %v313
        %v339 = vpop.f32.mrf.mxu0
        %v340 = vadd.f32 0.0, %v339
        %v341 = vpop.f32.mrf.mxu0
        %v342 = vadd.f32 0.0, %v341
        %343 = vdwg.mxu0
        %v344 = vmax.f32 %v325, 0.0
        %v345 = vmax.f32 %v327, 0.0
        %v346 = vmax.f32 %v330, 0.0
        %v347 = vmax.f32 %v332, 0.0
        %v348 = vmax.f32 %v335, 0.0
        %v349 = vmax.f32 %v337, 0.0
        %v350 = vmax.f32 %v340, 0.0
        %v351 = vmax.f32 %v342, 0.0
        %v352 = vpack.c.bf16 %v344, %v344
        %v353 = vpack.c.bf16 %v345, %v345
        %v354 = vpack.c.bf16 %v346, %v346
        %v355 = vpack.c.bf16 %v347, %v347
        %v356 = vpack.c.bf16 %v348, %v348
        %v357 = vpack.c.bf16 %v349, %v349
        %v358 = vpack.c.bf16 %v350, %v350
        %v359 = vpack.c.bf16 %v351, %v351
        %360 = vst [vmem:[#allocation2] sm:$0xf] %v352
        %361 = vst [vmem:[#allocation2 + $0x4] sm:$0xf] %v353
        %362 = vst [vmem:[#allocation2 + $0x8] sm:$0xf] %v354
        %363 = vst [vmem:[#allocation2 + $0xc] sm:$0xf] %v355
        %364 = vst [vmem:[#allocation2 + $0x10] sm:$0xf] %v356
        %365 = vst [vmem:[#allocation2 + $0x14] sm:$0xf] %v357
        %366 = vst [vmem:[#allocation2 + $0x18] sm:$0xf] %v358
        %367 = vst [vmem:[#allocation2 + $0x1c] sm:$0xf] %v359
        %v368 = vlaneseq
        %v369 = vand.u32 %v368, 127
        %v370 = vstv %s270
        %v371 = vadd.s32 %v370, %v369
        %vm372 = vcmp.ge.s32.totalorder %v371, 0
        %vm373 = vcmp.lt.s32.totalorder %v371, 31
        %vm374 = vmand %vm372, %vm373
        %v375 = vsel %vm374, 1, 0
        %v376 = vcvt.s32.f32 %v375
        %v377 = vld [vmem:[#allocation2] sm:$0xf]
        %v378 = vld [vmem:[#allocation2 + $0x4] sm:$0xf]
        %v379 = vld [vmem:[#allocation2 + $0x8] sm:$0xf]
        %v380 = vld [vmem:[#allocation2 + $0xc] sm:$0xf]
        %v381 = vld [vmem:[#allocation2 + $0x10] sm:$0xf]
        %v382 = vld [vmem:[#allocation2 + $0x14] sm:$0xf]
        %v383 = vld [vmem:[#allocation2 + $0x18] sm:$0xf]
        %v384 = vld [vmem:[#allocation2 + $0x1c] sm:$0xf]
        %v385 = vld [vmem:[#allocation3] sm:$0xf]
        %v386 = vld [vmem:[#allocation3 + $0x4] sm:$0xf]
        %v387 = vld [vmem:[#allocation3 + $0x8] sm:$0xf]
        %v388 = vld [vmem:[#allocation3 + $0xc] sm:$0xf]
        %v389 = vld [vmem:[#allocation3 + $0x10] sm:$0xf]
        %v390 = vld [vmem:[#allocation3 + $0x14] sm:$0xf]
        %v391 = vld [vmem:[#allocation3 + $0x18] sm:$0xf]
        %v392 = vld [vmem:[#allocation3 + $0x1c] sm:$0xf]
        %v401 = vunpack.c.l.b16 %v385
        %v402 = vunpack.c.l.b16 %v386
        %v403 = vunpack.c.l.b16 %v387
        %v404 = vunpack.c.l.b16 %v388
        %v405 = vunpack.c.l.b16 %v389
        %v406 = vunpack.c.l.b16 %v390
        %v407 = vunpack.c.l.b16 %v391
        %v408 = vunpack.c.l.b16 %v392
        %v409 = vpack.c.b16 %v402, %v401
        %v410 = vpack.c.b16 %v404, %v403
        %v411 = vpack.c.b16 %v406, %v405
        %v412 = vpack.c.b16 %v408, %v407
        %v421 = vunpack.c.l.b16 %v377
        %v422 = vunpack.c.l.b16 %v378
        %v423 = vunpack.c.l.b16 %v379
        %v424 = vunpack.c.l.b16 %v380
        %v425 = vunpack.c.l.b16 %v381
        %v426 = vunpack.c.l.b16 %v382
        %v427 = vunpack.c.l.b16 %v383
        %v428 = vunpack.c.l.b16 %v384
        %v429 = vpack.c.b16 %v422, %v421
        %v430 = vpack.c.b16 %v424, %v423
        %v431 = vpack.c.b16 %v426, %v425
        %v432 = vpack.c.b16 %v428, %v427
        %vm437 = vcmask 523264
        %v439 = vsel %vm437, %v409, 0
        %v442 = vsel %vm437, %v410, 0
        %v445 = vsel %vm437, %v411, 0
        %v448 = vsel %vm437, %v412, 0
        %450 = vmatpush.bf16.msra.mxu0 0
        %451 = vmatpush.bf16.msra.mxu0 0
        %452 = vmatpush.bf16.msra.mxu0 0
        %453 = vmatpush.bf16.msra.mxu0 0
        %454 = vmatpush.bf16.msra.mxu0 %v432
        %455 = vmatpush.bf16.msra.mxu0 %v431
        %456 = vmatpush.bf16.msra.mxu0 %v430
        %457 = vmatpush.bf16.msra.mxu0 %v429
        %458 = vmatmul.bf16.gmra.mxu0 %v439
        %v459 = vpop.f32.mrf.mxu0
        %v460 = vadd.f32 0.0, %v459
        %v461 = vpop.f32.mrf.mxu0
        %v462 = vadd.f32 0.0, %v461
        %463 = vmatmul.bf16.gmra.mxu0 %v442
        %v464 = vpop.f32.mrf.mxu0
        %v465 = vadd.f32 0.0, %v464
        %v466 = vpop.f32.mrf.mxu0
        %v467 = vadd.f32 0.0, %v466
        %468 = vmatmul.bf16.gmra.mxu0 %v445
        %v469 = vpop.f32.mrf.mxu0
        %v470 = vadd.f32 0.0, %v469
        %v471 = vpop.f32.mrf.mxu0
        %v472 = vadd.f32 0.0, %v471
        %473 = vmatmul.bf16.gmra.mxu0 %v448
        %v474 = vpop.f32.mrf.mxu0
        %v475 = vadd.f32 0.0, %v474
        %v476 = vpop.f32.mrf.mxu0
        %v477 = vadd.f32 0.0, %v476
        %478 = vdwg.mxu0
        %s479 = scalar_lea.vmem [#allocation3], 32
        %v480 = vld [vmem:[%s479] sm:$0xf]
        %v481 = vld [vmem:[%s479 + $0x4] sm:$0xf]
        %v482 = vld [vmem:[%s479 + $0x8] sm:$0xf]
        %v483 = vld [vmem:[%s479 + $0xc] sm:$0xf]
        %v484 = vld [vmem:[%s479 + $0x10] sm:$0xf]
        %v485 = vld [vmem:[%s479 + $0x14] sm:$0xf]
        %v486 = vld [vmem:[%s479 + $0x18] sm:$0xf]
        %v487 = vld [vmem:[%s479 + $0x1c] sm:$0xf]
        %v496 = vunpack.c.l.b16 %v480
        %v497 = vunpack.c.l.b16 %v481
        %v498 = vunpack.c.l.b16 %v482
        %v499 = vunpack.c.l.b16 %v483
        %v500 = vunpack.c.l.b16 %v484
        %v501 = vunpack.c.l.b16 %v485
        %v502 = vunpack.c.l.b16 %v486
        %v503 = vunpack.c.l.b16 %v487
        %v504 = vpack.c.b16 %v497, %v496
        %v505 = vpack.c.b16 %v499, %v498
        %v506 = vpack.c.b16 %v501, %v500
        %v507 = vpack.c.b16 %v503, %v502
        %v509 = vsel %vm437, %v504, 0
        %v512 = vsel %vm437, %v505, 0
        %v515 = vsel %vm437, %v506, 0
        %v518 = vsel %vm437, %v507, 0
        %520 = vmatpush.bf16.msra.mxu0 0
        %521 = vmatpush.bf16.msra.mxu0 0
        %522 = vmatpush.bf16.msra.mxu0 0
        %523 = vmatpush.bf16.msra.mxu0 0
        %524 = vmatpush.bf16.msra.mxu0 %v432
        %525 = vmatpush.bf16.msra.mxu0 %v431
        %526 = vmatpush.bf16.msra.mxu0 %v430
        %527 = vmatpush.bf16.msra.mxu0 %v429
        %528 = vmatmul.bf16.gmra.mxu0 %v509
        %v529 = vpop.f32.mrf.mxu0
        %v530 = vadd.f32 0.0, %v529
        %v531 = vpop.f32.mrf.mxu0
        %v532 = vadd.f32 0.0, %v531
        %533 = vmatmul.bf16.gmra.mxu0 %v512
        %v534 = vpop.f32.mrf.mxu0
        %v535 = vadd.f32 0.0, %v534
        %v536 = vpop.f32.mrf.mxu0
        %v537 = vadd.f32 0.0, %v536
        %538 = vmatmul.bf16.gmra.mxu0 %v515
        %v539 = vpop.f32.mrf.mxu0
        %v540 = vadd.f32 0.0, %v539
        %v541 = vpop.f32.mrf.mxu0
        %v542 = vadd.f32 0.0, %v541
        %543 = vmatmul.bf16.gmra.mxu0 %v518
        %v544 = vpop.f32.mrf.mxu0
        %v545 = vadd.f32 0.0, %v544
        %v546 = vpop.f32.mrf.mxu0
        %v547 = vadd.f32 0.0, %v546
        %548 = vdwg.mxu0
        %s549 = scalar_lea.vmem [#allocation3], 64
        %v550 = vld [vmem:[%s549] sm:$0xf]
        %v551 = vld [vmem:[%s549 + $0x4] sm:$0xf]
        %v552 = vld [vmem:[%s549 + $0x8] sm:$0xf]
        %v553 = vld [vmem:[%s549 + $0xc] sm:$0xf]
        %v554 = vld [vmem:[%s549 + $0x10] sm:$0xf]
        %v555 = vld [vmem:[%s549 + $0x14] sm:$0xf]
        %v556 = vld [vmem:[%s549 + $0x18] sm:$0xf]
        %v557 = vld [vmem:[%s549 + $0x1c] sm:$0xf]
        %v566 = vunpack.c.l.b16 %v550
        %v567 = vunpack.c.l.b16 %v551
        %v568 = vunpack.c.l.b16 %v552
        %v569 = vunpack.c.l.b16 %v553
        %v570 = vunpack.c.l.b16 %v554
        %v571 = vunpack.c.l.b16 %v555
        %v572 = vunpack.c.l.b16 %v556
        %v573 = vunpack.c.l.b16 %v557
        %v574 = vpack.c.b16 %v567, %v566
        %v575 = vpack.c.b16 %v569, %v568
        %v576 = vpack.c.b16 %v571, %v570
        %v577 = vpack.c.b16 %v573, %v572
        %v579 = vsel %vm437, %v574, 0
        %v582 = vsel %vm437, %v575, 0
        %v585 = vsel %vm437, %v576, 0
        %v588 = vsel %vm437, %v577, 0
        %590 = vmatpush.bf16.msra.mxu0 0
        %591 = vmatpush.bf16.msra.mxu0 0
        %592 = vmatpush.bf16.msra.mxu0 0
        %593 = vmatpush.bf16.msra.mxu0 0
        %594 = vmatpush.bf16.msra.mxu0 %v432
        %595 = vmatpush.bf16.msra.mxu0 %v431
        %596 = vmatpush.bf16.msra.mxu0 %v430
        %597 = vmatpush.bf16.msra.mxu0 %v429
        %598 = vmatmul.bf16.gmra.mxu0 %v579
        %v599 = vpop.f32.mrf.mxu0
        %v600 = vadd.f32 0.0, %v599
        %v601 = vpop.f32.mrf.mxu0
        %v602 = vadd.f32 0.0, %v601
        %603 = vmatmul.bf16.gmra.mxu0 %v582
        %v604 = vpop.f32.mrf.mxu0
        %v605 = vadd.f32 0.0, %v604
        %v606 = vpop.f32.mrf.mxu0
        %v607 = vadd.f32 0.0, %v606
        %608 = vmatmul.bf16.gmra.mxu0 %v585
        %v609 = vpop.f32.mrf.mxu0
        %v610 = vadd.f32 0.0, %v609
        %v611 = vpop.f32.mrf.mxu0
        %v612 = vadd.f32 0.0, %v611
        %613 = vmatmul.bf16.gmra.mxu0 %v588
        %v614 = vpop.f32.mrf.mxu0
        %v615 = vadd.f32 0.0, %v614
        %v616 = vpop.f32.mrf.mxu0
        %v617 = vadd.f32 0.0, %v616
        %618 = vdwg.mxu0
        %619 = vrot.lane.b32.xlu0 %v460, 1
        %v620 = vpop.permute.xlu0 %619
        %621 = vrot.lane.b32.xlu0 %v462, 1
        %v622 = vpop.permute.xlu0 %621
        %623 = vrot.lane.b32.xlu0 %v465, 1
        %v624 = vpop.permute.xlu0 %623
        %625 = vrot.lane.b32.xlu0 %v467, 1
        %v626 = vpop.permute.xlu0 %625
        %627 = vrot.lane.b32.xlu0 %v470, 1
        %v628 = vpop.permute.xlu0 %627
        %629 = vrot.lane.b32.xlu0 %v472, 1
        %v630 = vpop.permute.xlu0 %629
        %631 = vrot.lane.b32.xlu0 %v475, 1
        %v632 = vpop.permute.xlu0 %631
        %633 = vrot.lane.b32.xlu0 %v477, 1
        %v634 = vpop.permute.xlu0 %633
        %v635 = vadd.f32 %v620, %v530
        %v636 = vadd.f32 %v622, %v532
        %v637 = vadd.f32 %v624, %v535
        %v638 = vadd.f32 %v626, %v537
        %v639 = vadd.f32 %v628, %v540
        %v640 = vadd.f32 %v630, %v542
        %v641 = vadd.f32 %v632, %v545
        %v642 = vadd.f32 %v634, %v547
        %643 = vrot.lane.b32.xlu0 %v600, 127
        %v644 = vpop.permute.xlu0 %643
        %645 = vrot.lane.b32.xlu0 %v602, 127
        %v646 = vpop.permute.xlu0 %645
        %647 = vrot.lane.b32.xlu0 %v605, 127
        %v648 = vpop.permute.xlu0 %647
        %649 = vrot.lane.b32.xlu0 %v607, 127
        %v650 = vpop.permute.xlu0 %649
        %651 = vrot.lane.b32.xlu0 %v610, 127
        %v652 = vpop.permute.xlu0 %651
        %653 = vrot.lane.b32.xlu0 %v612, 127
        %v654 = vpop.permute.xlu0 %653
        %655 = vrot.lane.b32.xlu0 %v615, 127
        %v656 = vpop.permute.xlu0 %655
        %657 = vrot.lane.b32.xlu0 %v617, 127
        %v658 = vpop.permute.xlu0 %657
        %v659 = vadd.f32 %v635, %v644
        %v660 = vadd.f32 %v636, %v646
        %v661 = vadd.f32 %v637, %v648
        %v662 = vadd.f32 %v638, %v650
        %v663 = vadd.f32 %v639, %v652
        %v664 = vadd.f32 %v640, %v654
        %v665 = vadd.f32 %v641, %v656
        %v666 = vadd.f32 %v642, %v658
        %v667 = vld [vmem:[%s3] sm:$0xff]
        %v668 = vld [vmem:[%s3 + $0x8] sm:$0xff]
        %v669 = vld [vmem:[%s3 + $0x10] sm:$0xff]
        %v670 = vld [vmem:[%s3 + $0x18] sm:$0xff]
        %v671 = vld [vmem:[%s3 + $0x20] sm:$0xff]
        %v672 = vld [vmem:[%s3 + $0x28] sm:$0xff]
        %v673 = vld [vmem:[%s3 + $0x30] sm:$0xff]
        %v674 = vld [vmem:[%s3 + $0x38] sm:$0xff]
        %676 = vset.pattern.permute.xlu0 0
        %677 = vperm.xlu0 %676, %v667
        %v678 = vpop.permute.xlu0 %677
        %681 = vset.pattern.permute.xlu0 0
        %682 = vperm.xlu0 %681, %v668
        %v683 = vpop.permute.xlu0 %682
        %686 = vset.pattern.permute.xlu0 0
        %687 = vperm.xlu0 %686, %v669
        %v688 = vpop.permute.xlu0 %687
        %691 = vset.pattern.permute.xlu0 0
        %692 = vperm.xlu0 %691, %v670
        %v693 = vpop.permute.xlu0 %692
        %696 = vset.pattern.permute.xlu0 0
        %697 = vperm.xlu0 %696, %v671
        %v698 = vpop.permute.xlu0 %697
        %701 = vset.pattern.permute.xlu0 0
        %702 = vperm.xlu0 %701, %v672
        %v703 = vpop.permute.xlu0 %702
        %706 = vset.pattern.permute.xlu0 0
        %707 = vperm.xlu0 %706, %v673
        %v708 = vpop.permute.xlu0 %707
        %711 = vset.pattern.permute.xlu0 0
        %712 = vperm.xlu0 %711, %v674
        %v713 = vpop.permute.xlu0 %712
        %v715 = vadd.f32 %v659, %v678
        %v716 = vadd.f32 %v660, %v683
        %v717 = vadd.f32 %v661, %v688
        %v718 = vadd.f32 %v662, %v693
        %v719 = vadd.f32 %v663, %v698
        %v720 = vadd.f32 %v664, %v703
        %v721 = vadd.f32 %v665, %v708
        %v722 = vadd.f32 %v666, %v713
        %v723 = vmax.f32 %v715, 0.0
        %v724 = vmax.f32 %v716, 0.0
        %v725 = vmax.f32 %v717, 0.0
        %v726 = vmax.f32 %v718, 0.0
        %v727 = vmax.f32 %v719, 0.0
        %v728 = vmax.f32 %v720, 0.0
        %v729 = vmax.f32 %v721, 0.0
        %v730 = vmax.f32 %v722, 0.0
        %v731 = vmul.f32 %v723, %v376
        %v732 = vmul.f32 %v724, %v376
        %v733 = vmul.f32 %v725, %v376
        %v734 = vmul.f32 %v726, %v376
        %v735 = vmul.f32 %v727, %v376
        %v736 = vmul.f32 %v728, %v376
        %v737 = vmul.f32 %v729, %v376
        %v738 = vmul.f32 %v730, %v376
        %v739 = vpack.c.bf16 %v731, %v731
        %v740 = vpack.c.bf16 %v732, %v732
        %v741 = vpack.c.bf16 %v733, %v733
        %v742 = vpack.c.bf16 %v734, %v734
        %v743 = vpack.c.bf16 %v735, %v735
        %v744 = vpack.c.bf16 %v736, %v736
        %v745 = vpack.c.bf16 %v737, %v737
        %v746 = vpack.c.bf16 %v738, %v738
        %747 = vst [vmem:[#allocation2] sm:$0xf] %v739
        %748 = vst [vmem:[#allocation2 + $0x4] sm:$0xf] %v740
        %749 = vst [vmem:[#allocation2 + $0x8] sm:$0xf] %v741
        %750 = vst [vmem:[#allocation2 + $0xc] sm:$0xf] %v742
        %751 = vst [vmem:[#allocation2 + $0x10] sm:$0xf] %v743
        %752 = vst [vmem:[#allocation2 + $0x14] sm:$0xf] %v744
        %753 = vst [vmem:[#allocation2 + $0x18] sm:$0xf] %v745
        %754 = vst [vmem:[#allocation2 + $0x1c] sm:$0xf] %v746
        %v755 = vld [vmem:[#allocation2] sm:$0xf]
        %v756 = vld [vmem:[#allocation2 + $0x4] sm:$0xf]
        %v757 = vld [vmem:[#allocation2 + $0x8] sm:$0xf]
        %v758 = vld [vmem:[#allocation2 + $0xc] sm:$0xf]
        %v759 = vld [vmem:[#allocation2 + $0x10] sm:$0xf]
        %v760 = vld [vmem:[#allocation2 + $0x14] sm:$0xf]
        %v761 = vld [vmem:[#allocation2 + $0x18] sm:$0xf]
        %v762 = vld [vmem:[#allocation2 + $0x1c] sm:$0xf]
        %s763 = scalar_lea.vmem [#allocation3], 96
        %v764 = vld [vmem:[%s763] sm:$0xf]
        %v765 = vld [vmem:[%s763 + $0x4] sm:$0xf]
        %v766 = vld [vmem:[%s763 + $0x8] sm:$0xf]
        %v767 = vld [vmem:[%s763 + $0xc] sm:$0xf]
        %v768 = vld [vmem:[%s763 + $0x10] sm:$0xf]
        %v769 = vld [vmem:[%s763 + $0x14] sm:$0xf]
        %v770 = vld [vmem:[%s763 + $0x18] sm:$0xf]
        %v771 = vld [vmem:[%s763 + $0x1c] sm:$0xf]
        %v780 = vunpack.c.l.b16 %v764
        %v781 = vunpack.c.l.b16 %v765
        %v782 = vunpack.c.l.b16 %v766
        %v783 = vunpack.c.l.b16 %v767
        %v784 = vunpack.c.l.b16 %v768
        %v785 = vunpack.c.l.b16 %v769
        %v786 = vunpack.c.l.b16 %v770
        %v787 = vunpack.c.l.b16 %v771
        %v788 = vpack.c.b16 %v781, %v780
        %v789 = vpack.c.b16 %v783, %v782
        %v790 = vpack.c.b16 %v785, %v784
        %v791 = vpack.c.b16 %v787, %v786
        %v800 = vunpack.c.l.b16 %v755
        %v801 = vunpack.c.l.b16 %v756
        %v802 = vunpack.c.l.b16 %v757
        %v803 = vunpack.c.l.b16 %v758
        %v804 = vunpack.c.l.b16 %v759
        %v805 = vunpack.c.l.b16 %v760
        %v806 = vunpack.c.l.b16 %v761
        %v807 = vunpack.c.l.b16 %v762
        %v808 = vpack.c.b16 %v801, %v800
        %v809 = vpack.c.b16 %v803, %v802
        %v810 = vpack.c.b16 %v805, %v804
        %v811 = vpack.c.b16 %v807, %v806
        %v817 = vsel %vm437, %v788, 0
        %v820 = vsel %vm437, %v789, 0
        %v823 = vsel %vm437, %v790, 0
        %v826 = vsel %vm437, %v791, 0
        %828 = vmatpush.bf16.msra.mxu0 0
        %829 = vmatpush.bf16.msra.mxu0 0
        %830 = vmatpush.bf16.msra.mxu0 0
        %831 = vmatpush.bf16.msra.mxu0 0
        %832 = vmatpush.bf16.msra.mxu0 %v811
        %833 = vmatpush.bf16.msra.mxu0 %v810
        %834 = vmatpush.bf16.msra.mxu0 %v809
        %835 = vmatpush.bf16.msra.mxu0 %v808
        %836 = vmatmul.bf16.gmra.mxu0 %v817
        %v837 = vpop.f32.mrf.mxu0
        %v838 = vadd.f32 0.0, %v837
        %v839 = vpop.f32.mrf.mxu0
        %v840 = vadd.f32 0.0, %v839
        %841 = vmatmul.bf16.gmra.mxu0 %v820
        %v842 = vpop.f32.mrf.mxu0
        %v843 = vadd.f32 0.0, %v842
        %v844 = vpop.f32.mrf.mxu0
        %v845 = vadd.f32 0.0, %v844
        %846 = vmatmul.bf16.gmra.mxu0 %v823
        %v847 = vpop.f32.mrf.mxu0
        %v848 = vadd.f32 0.0, %v847
        %v849 = vpop.f32.mrf.mxu0
        %v850 = vadd.f32 0.0, %v849
        %851 = vmatmul.bf16.gmra.mxu0 %v826
        %v852 = vpop.f32.mrf.mxu0
        %v853 = vadd.f32 0.0, %v852
        %v854 = vpop.f32.mrf.mxu0
        %v855 = vadd.f32 0.0, %v854
        %856 = vdwg.mxu0
        %s857 = scalar_lea.vmem [#allocation3], 128
        %v858 = vld [vmem:[%s857] sm:$0xf]
        %v859 = vld [vmem:[%s857 + $0x4] sm:$0xf]
        %v860 = vld [vmem:[%s857 + $0x8] sm:$0xf]
        %v861 = vld [vmem:[%s857 + $0xc] sm:$0xf]
        %v862 = vld [vmem:[%s857 + $0x10] sm:$0xf]
        %v863 = vld [vmem:[%s857 + $0x14] sm:$0xf]
        %v864 = vld [vmem:[%s857 + $0x18] sm:$0xf]
        %v865 = vld [vmem:[%s857 + $0x1c] sm:$0xf]
        %v874 = vunpack.c.l.b16 %v858
        %v875 = vunpack.c.l.b16 %v859
        %v876 = vunpack.c.l.b16 %v860
        %v877 = vunpack.c.l.b16 %v861
        %v878 = vunpack.c.l.b16 %v862
        %v879 = vunpack.c.l.b16 %v863
        %v880 = vunpack.c.l.b16 %v864
        %v881 = vunpack.c.l.b16 %v865
        %v882 = vpack.c.b16 %v875, %v874
        %v883 = vpack.c.b16 %v877, %v876
        %v884 = vpack.c.b16 %v879, %v878
        %v885 = vpack.c.b16 %v881, %v880
        %v887 = vsel %vm437, %v882, 0
        %v890 = vsel %vm437, %v883, 0
        %v893 = vsel %vm437, %v884, 0
        %v896 = vsel %vm437, %v885, 0
        %898 = vmatpush.bf16.msra.mxu0 0
        %899 = vmatpush.bf16.msra.mxu0 0
        %900 = vmatpush.bf16.msra.mxu0 0
        %901 = vmatpush.bf16.msra.mxu0 0
        %902 = vmatpush.bf16.msra.mxu0 %v811
        %903 = vmatpush.bf16.msra.mxu0 %v810
        %904 = vmatpush.bf16.msra.mxu0 %v809
        %905 = vmatpush.bf16.msra.mxu0 %v808
        %906 = vmatmul.bf16.gmra.mxu0 %v887
        %v907 = vpop.f32.mrf.mxu0
        %v908 = vadd.f32 0.0, %v907
        %v909 = vpop.f32.mrf.mxu0
        %v910 = vadd.f32 0.0, %v909
        %911 = vmatmul.bf16.gmra.mxu0 %v890
        %v912 = vpop.f32.mrf.mxu0
        %v913 = vadd.f32 0.0, %v912
        %v914 = vpop.f32.mrf.mxu0
        %v915 = vadd.f32 0.0, %v914
        %916 = vmatmul.bf16.gmra.mxu0 %v893
        %v917 = vpop.f32.mrf.mxu0
        %v918 = vadd.f32 0.0, %v917
        %v919 = vpop.f32.mrf.mxu0
        %v920 = vadd.f32 0.0, %v919
        %921 = vmatmul.bf16.gmra.mxu0 %v896
        %v922 = vpop.f32.mrf.mxu0
        %v923 = vadd.f32 0.0, %v922
        %v924 = vpop.f32.mrf.mxu0
        %v925 = vadd.f32 0.0, %v924
        %926 = vdwg.mxu0
        %s927 = scalar_lea.vmem [#allocation3], 160
        %v928 = vld [vmem:[%s927] sm:$0xf]
        %v929 = vld [vmem:[%s927 + $0x4] sm:$0xf]
        %v930 = vld [vmem:[%s927 + $0x8] sm:$0xf]
        %v931 = vld [vmem:[%s927 + $0xc] sm:$0xf]
        %v932 = vld [vmem:[%s927 + $0x10] sm:$0xf]
        %v933 = vld [vmem:[%s927 + $0x14] sm:$0xf]
        %v934 = vld [vmem:[%s927 + $0x18] sm:$0xf]
        %v935 = vld [vmem:[%s927 + $0x1c] sm:$0xf]
        %v944 = vunpack.c.l.b16 %v928
        %v945 = vunpack.c.l.b16 %v929
        %v946 = vunpack.c.l.b16 %v930
        %v947 = vunpack.c.l.b16 %v931
        %v948 = vunpack.c.l.b16 %v932
        %v949 = vunpack.c.l.b16 %v933
        %v950 = vunpack.c.l.b16 %v934
        %v951 = vunpack.c.l.b16 %v935
        %v952 = vpack.c.b16 %v945, %v944
        %v953 = vpack.c.b16 %v947, %v946
        %v954 = vpack.c.b16 %v949, %v948
        %v955 = vpack.c.b16 %v951, %v950
        %v957 = vsel %vm437, %v952, 0
        %v960 = vsel %vm437, %v953, 0
        %v963 = vsel %vm437, %v954, 0
        %v966 = vsel %vm437, %v955, 0
        %968 = vmatpush.bf16.msra.mxu0 0
        %969 = vmatpush.bf16.msra.mxu0 0
        %970 = vmatpush.bf16.msra.mxu0 0
        %971 = vmatpush.bf16.msra.mxu0 0
        %972 = vmatpush.bf16.msra.mxu0 %v811
        %973 = vmatpush.bf16.msra.mxu0 %v810
        %974 = vmatpush.bf16.msra.mxu0 %v809
        %975 = vmatpush.bf16.msra.mxu0 %v808
        %976 = vmatmul.bf16.gmra.mxu0 %v957
        %v977 = vpop.f32.mrf.mxu0
        %v978 = vadd.f32 0.0, %v977
        %v979 = vpop.f32.mrf.mxu0
        %v980 = vadd.f32 0.0, %v979
        %981 = vmatmul.bf16.gmra.mxu0 %v960
        %v982 = vpop.f32.mrf.mxu0
        %v983 = vadd.f32 0.0, %v982
        %v984 = vpop.f32.mrf.mxu0
        %v985 = vadd.f32 0.0, %v984
        %986 = vmatmul.bf16.gmra.mxu0 %v963
        %v987 = vpop.f32.mrf.mxu0
        %v988 = vadd.f32 0.0, %v987
        %v989 = vpop.f32.mrf.mxu0
        %v990 = vadd.f32 0.0, %v989
        %991 = vmatmul.bf16.gmra.mxu0 %v966
        %v992 = vpop.f32.mrf.mxu0
        %v993 = vadd.f32 0.0, %v992
        %v994 = vpop.f32.mrf.mxu0
        %v995 = vadd.f32 0.0, %v994
        %996 = vdwg.mxu0
        %997 = vrot.lane.b32.xlu0 %v838, 2
        %v998 = vpop.permute.xlu0 %997
        %999 = vrot.lane.b32.xlu0 %v840, 2
        %v1000 = vpop.permute.xlu0 %999
        %1001 = vrot.lane.b32.xlu0 %v843, 2
        %v1002 = vpop.permute.xlu0 %1001
        %1003 = vrot.lane.b32.xlu0 %v845, 2
        %v1004 = vpop.permute.xlu0 %1003
        %1005 = vrot.lane.b32.xlu0 %v848, 2
        %v1006 = vpop.permute.xlu0 %1005
        %1007 = vrot.lane.b32.xlu0 %v850, 2
        %v1008 = vpop.permute.xlu0 %1007
        %1009 = vrot.lane.b32.xlu0 %v853, 2
        %v1010 = vpop.permute.xlu0 %1009
        %1011 = vrot.lane.b32.xlu0 %v855, 2
        %v1012 = vpop.permute.xlu0 %1011
        %v1013 = vadd.f32 %v998, %v908
        %v1014 = vadd.f32 %v1000, %v910
        %v1015 = vadd.f32 %v1002, %v913
        %v1016 = vadd.f32 %v1004, %v915
        %v1017 = vadd.f32 %v1006, %v918
        %v1018 = vadd.f32 %v1008, %v920
        %v1019 = vadd.f32 %v1010, %v923
        %v1020 = vadd.f32 %v1012, %v925
        %1021 = vrot.lane.b32.xlu0 %v978, 126
        %v1022 = vpop.permute.xlu0 %1021
        %1023 = vrot.lane.b32.xlu0 %v980, 126
        %v1024 = vpop.permute.xlu0 %1023
        %1025 = vrot.lane.b32.xlu0 %v983, 126
        %v1026 = vpop.permute.xlu0 %1025
        %1027 = vrot.lane.b32.xlu0 %v985, 126
        %v1028 = vpop.permute.xlu0 %1027
        %1029 = vrot.lane.b32.xlu0 %v988, 126
        %v1030 = vpop.permute.xlu0 %1029
        %1031 = vrot.lane.b32.xlu0 %v990, 126
        %v1032 = vpop.permute.xlu0 %1031
        %1033 = vrot.lane.b32.xlu0 %v993, 126
        %v1034 = vpop.permute.xlu0 %1033
        %1035 = vrot.lane.b32.xlu0 %v995, 126
        %v1036 = vpop.permute.xlu0 %1035
        %v1037 = vadd.f32 %v1013, %v1022
        %v1038 = vadd.f32 %v1014, %v1024
        %v1039 = vadd.f32 %v1015, %v1026
        %v1040 = vadd.f32 %v1016, %v1028
        %v1041 = vadd.f32 %v1017, %v1030
        %v1042 = vadd.f32 %v1018, %v1032
        %v1043 = vadd.f32 %v1019, %v1034
        %v1044 = vadd.f32 %v1020, %v1036
        %s1045 = scalar_lea.vmem %s3, 64
        %v1046 = vld [vmem:[%s1045] sm:$0xff]
        %v1047 = vld [vmem:[%s1045 + $0x8] sm:$0xff]
        %v1048 = vld [vmem:[%s1045 + $0x10] sm:$0xff]
        %v1049 = vld [vmem:[%s1045 + $0x18] sm:$0xff]
        %v1050 = vld [vmem:[%s1045 + $0x20] sm:$0xff]
        %v1051 = vld [vmem:[%s1045 + $0x28] sm:$0xff]
        %v1052 = vld [vmem:[%s1045 + $0x30] sm:$0xff]
        %v1053 = vld [vmem:[%s1045 + $0x38] sm:$0xff]
        %1055 = vset.pattern.permute.xlu0 0
        %1056 = vperm.xlu0 %1055, %v1046
        %v1057 = vpop.permute.xlu0 %1056
        %1060 = vset.pattern.permute.xlu0 0
        %1061 = vperm.xlu0 %1060, %v1047
        %v1062 = vpop.permute.xlu0 %1061
        %1065 = vset.pattern.permute.xlu0 0
        %1066 = vperm.xlu0 %1065, %v1048
        %v1067 = vpop.permute.xlu0 %1066
        %1070 = vset.pattern.permute.xlu0 0
        %1071 = vperm.xlu0 %1070, %v1049
        %v1072 = vpop.permute.xlu0 %1071
        %1075 = vset.pattern.permute.xlu0 0
        %1076 = vperm.xlu0 %1075, %v1050
        %v1077 = vpop.permute.xlu0 %1076
        %1080 = vset.pattern.permute.xlu0 0
        %1081 = vperm.xlu0 %1080, %v1051
        %v1082 = vpop.permute.xlu0 %1081
        %1085 = vset.pattern.permute.xlu0 0
        %1086 = vperm.xlu0 %1085, %v1052
        %v1087 = vpop.permute.xlu0 %1086
        %1090 = vset.pattern.permute.xlu0 0
        %1091 = vperm.xlu0 %1090, %v1053
        %v1092 = vpop.permute.xlu0 %1091
        %v1094 = vadd.f32 %v1037, %v1057
        %v1095 = vadd.f32 %v1038, %v1062
        %v1096 = vadd.f32 %v1039, %v1067
        %v1097 = vadd.f32 %v1040, %v1072
        %v1098 = vadd.f32 %v1041, %v1077
        %v1099 = vadd.f32 %v1042, %v1082
        %v1100 = vadd.f32 %v1043, %v1087
        %v1101 = vadd.f32 %v1044, %v1092
        %v1102 = vmax.f32 %v1094, 0.0
        %v1103 = vmax.f32 %v1095, 0.0
        %v1104 = vmax.f32 %v1096, 0.0
        %v1105 = vmax.f32 %v1097, 0.0
        %v1106 = vmax.f32 %v1098, 0.0
        %v1107 = vmax.f32 %v1099, 0.0
        %v1108 = vmax.f32 %v1100, 0.0
        %v1109 = vmax.f32 %v1101, 0.0
        %v1110 = vmul.f32 %v1102, %v376
        %v1111 = vmul.f32 %v1103, %v376
        %v1112 = vmul.f32 %v1104, %v376
        %v1113 = vmul.f32 %v1105, %v376
        %v1114 = vmul.f32 %v1106, %v376
        %v1115 = vmul.f32 %v1107, %v376
        %v1116 = vmul.f32 %v1108, %v376
        %v1117 = vmul.f32 %v1109, %v376
        %v1118 = vpack.c.bf16 %v1110, %v1110
        %v1119 = vpack.c.bf16 %v1111, %v1111
        %v1120 = vpack.c.bf16 %v1112, %v1112
        %v1121 = vpack.c.bf16 %v1113, %v1113
        %v1122 = vpack.c.bf16 %v1114, %v1114
        %v1123 = vpack.c.bf16 %v1115, %v1115
        %v1124 = vpack.c.bf16 %v1116, %v1116
        %v1125 = vpack.c.bf16 %v1117, %v1117
        %1126 = vst [vmem:[#allocation2] sm:$0xf] %v1118
        %1127 = vst [vmem:[#allocation2 + $0x4] sm:$0xf] %v1119
        %1128 = vst [vmem:[#allocation2 + $0x8] sm:$0xf] %v1120
        %1129 = vst [vmem:[#allocation2 + $0xc] sm:$0xf] %v1121
        %1130 = vst [vmem:[#allocation2 + $0x10] sm:$0xf] %v1122
        %1131 = vst [vmem:[#allocation2 + $0x14] sm:$0xf] %v1123
        %1132 = vst [vmem:[#allocation2 + $0x18] sm:$0xf] %v1124
        %1133 = vst [vmem:[#allocation2 + $0x1c] sm:$0xf] %v1125
        %v1134 = vld [vmem:[#allocation2] sm:$0xf]
        %v1135 = vld [vmem:[#allocation2 + $0x4] sm:$0xf]
        %v1136 = vld [vmem:[#allocation2 + $0x8] sm:$0xf]
        %v1137 = vld [vmem:[#allocation2 + $0xc] sm:$0xf]
        %v1138 = vld [vmem:[#allocation2 + $0x10] sm:$0xf]
        %v1139 = vld [vmem:[#allocation2 + $0x14] sm:$0xf]
        %v1140 = vld [vmem:[#allocation2 + $0x18] sm:$0xf]
        %v1141 = vld [vmem:[#allocation2 + $0x1c] sm:$0xf]
        %s1142 = scalar_lea.vmem [#allocation3], 192
        %v1143 = vld [vmem:[%s1142] sm:$0xf]
        %v1144 = vld [vmem:[%s1142 + $0x4] sm:$0xf]
        %v1145 = vld [vmem:[%s1142 + $0x8] sm:$0xf]
        %v1146 = vld [vmem:[%s1142 + $0xc] sm:$0xf]
        %v1147 = vld [vmem:[%s1142 + $0x10] sm:$0xf]
        %v1148 = vld [vmem:[%s1142 + $0x14] sm:$0xf]
        %v1149 = vld [vmem:[%s1142 + $0x18] sm:$0xf]
        %v1150 = vld [vmem:[%s1142 + $0x1c] sm:$0xf]
        %v1159 = vunpack.c.l.b16 %v1143
        %v1160 = vunpack.c.l.b16 %v1144
        %v1161 = vunpack.c.l.b16 %v1145
        %v1162 = vunpack.c.l.b16 %v1146
        %v1163 = vunpack.c.l.b16 %v1147
        %v1164 = vunpack.c.l.b16 %v1148
        %v1165 = vunpack.c.l.b16 %v1149
        %v1166 = vunpack.c.l.b16 %v1150
        %v1167 = vpack.c.b16 %v1160, %v1159
        %v1168 = vpack.c.b16 %v1162, %v1161
        %v1169 = vpack.c.b16 %v1164, %v1163
        %v1170 = vpack.c.b16 %v1166, %v1165
        %v1179 = vunpack.c.l.b16 %v1134
        %v1180 = vunpack.c.l.b16 %v1135
        %v1181 = vunpack.c.l.b16 %v1136
        %v1182 = vunpack.c.l.b16 %v1137
        %v1183 = vunpack.c.l.b16 %v1138
        %v1184 = vunpack.c.l.b16 %v1139
        %v1185 = vunpack.c.l.b16 %v1140
        %v1186 = vunpack.c.l.b16 %v1141
        %v1187 = vpack.c.b16 %v1180, %v1179
        %v1188 = vpack.c.b16 %v1182, %v1181
        %v1189 = vpack.c.b16 %v1184, %v1183
        %v1190 = vpack.c.b16 %v1186, %v1185
        %v1196 = vsel %vm437, %v1167, 0
        %v1199 = vsel %vm437, %v1168, 0
        %v1202 = vsel %vm437, %v1169, 0
        %v1205 = vsel %vm437, %v1170, 0
        %1207 = vmatpush.bf16.msra.mxu0 0
        %1208 = vmatpush.bf16.msra.mxu0 0
        %1209 = vmatpush.bf16.msra.mxu0 0
        %1210 = vmatpush.bf16.msra.mxu0 0
        %1211 = vmatpush.bf16.msra.mxu0 %v1190
        %1212 = vmatpush.bf16.msra.mxu0 %v1189
        %1213 = vmatpush.bf16.msra.mxu0 %v1188
        %1214 = vmatpush.bf16.msra.mxu0 %v1187
        %1215 = vmatmul.bf16.gmra.mxu0 %v1196
        %v1216 = vpop.f32.mrf.mxu0
        %v1217 = vadd.f32 0.0, %v1216
        %v1218 = vpop.f32.mrf.mxu0
        %v1219 = vadd.f32 0.0, %v1218
        %1220 = vmatmul.bf16.gmra.mxu0 %v1199
        %v1221 = vpop.f32.mrf.mxu0
        %v1222 = vadd.f32 0.0, %v1221
        %v1223 = vpop.f32.mrf.mxu0
        %v1224 = vadd.f32 0.0, %v1223
        %1225 = vmatmul.bf16.gmra.mxu0 %v1202
        %v1226 = vpop.f32.mrf.mxu0
        %v1227 = vadd.f32 0.0, %v1226
        %v1228 = vpop.f32.mrf.mxu0
        %v1229 = vadd.f32 0.0, %v1228
        %1230 = vmatmul.bf16.gmra.mxu0 %v1205
        %v1231 = vpop.f32.mrf.mxu0
        %v1232 = vadd.f32 0.0, %v1231
        %v1233 = vpop.f32.mrf.mxu0
        %v1234 = vadd.f32 0.0, %v1233
        %1235 = vdwg.mxu0
        %s1236 = scalar_lea.vmem [#allocation3], 224
        %v1237 = vld [vmem:[%s1236] sm:$0xf]
        %v1238 = vld [vmem:[%s1236 + $0x4] sm:$0xf]
        %v1239 = vld [vmem:[%s1236 + $0x8] sm:$0xf]
        %v1240 = vld [vmem:[%s1236 + $0xc] sm:$0xf]
        %v1241 = vld [vmem:[%s1236 + $0x10] sm:$0xf]
        %v1242 = vld [vmem:[%s1236 + $0x14] sm:$0xf]
        %v1243 = vld [vmem:[%s1236 + $0x18] sm:$0xf]
        %v1244 = vld [vmem:[%s1236 + $0x1c] sm:$0xf]
        %v1253 = vunpack.c.l.b16 %v1237
        %v1254 = vunpack.c.l.b16 %v1238
        %v1255 = vunpack.c.l.b16 %v1239
        %v1256 = vunpack.c.l.b16 %v1240
        %v1257 = vunpack.c.l.b16 %v1241
        %v1258 = vunpack.c.l.b16 %v1242
        %v1259 = vunpack.c.l.b16 %v1243
        %v1260 = vunpack.c.l.b16 %v1244
        %v1261 = vpack.c.b16 %v1254, %v1253
        %v1262 = vpack.c.b16 %v1256, %v1255
        %v1263 = vpack.c.b16 %v1258, %v1257
        %v1264 = vpack.c.b16 %v1260, %v1259
        %v1266 = vsel %vm437, %v1261, 0
        %v1269 = vsel %vm437, %v1262, 0
        %v1272 = vsel %vm437, %v1263, 0
        %v1275 = vsel %vm437, %v1264, 0
        %1277 = vmatpush.bf16.msra.mxu0 0
        %1278 = vmatpush.bf16.msra.mxu0 0
        %1279 = vmatpush.bf16.msra.mxu0 0
        %1280 = vmatpush.bf16.msra.mxu0 0
        %1281 = vmatpush.bf16.msra.mxu0 %v1190
        %1282 = vmatpush.bf16.msra.mxu0 %v1189
        %1283 = vmatpush.bf16.msra.mxu0 %v1188
        %1284 = vmatpush.bf16.msra.mxu0 %v1187
        %1285 = vmatmul.bf16.gmra.mxu0 %v1266
        %v1286 = vpop.f32.mrf.mxu0
        %v1287 = vadd.f32 0.0, %v1286
        %v1288 = vpop.f32.mrf.mxu0
        %v1289 = vadd.f32 0.0, %v1288
        %1290 = vmatmul.bf16.gmra.mxu0 %v1269
        %v1291 = vpop.f32.mrf.mxu0
        %v1292 = vadd.f32 0.0, %v1291
        %v1293 = vpop.f32.mrf.mxu0
        %v1294 = vadd.f32 0.0, %v1293
        %1295 = vmatmul.bf16.gmra.mxu0 %v1272
        %v1296 = vpop.f32.mrf.mxu0
        %v1297 = vadd.f32 0.0, %v1296
        %v1298 = vpop.f32.mrf.mxu0
        %v1299 = vadd.f32 0.0, %v1298
        %1300 = vmatmul.bf16.gmra.mxu0 %v1275
        %v1301 = vpop.f32.mrf.mxu0
        %v1302 = vadd.f32 0.0, %v1301
        %v1303 = vpop.f32.mrf.mxu0
        %v1304 = vadd.f32 0.0, %v1303
        %1305 = vdwg.mxu0
        %s1306 = scalar_lea.vmem [#allocation3], 256
        %v1307 = vld [vmem:[%s1306] sm:$0xf]
        %v1308 = vld [vmem:[%s1306 + $0x4] sm:$0xf]
        %v1309 = vld [vmem:[%s1306 + $0x8] sm:$0xf]
        %v1310 = vld [vmem:[%s1306 + $0xc] sm:$0xf]
        %v1311 = vld [vmem:[%s1306 + $0x10] sm:$0xf]
        %v1312 = vld [vmem:[%s1306 + $0x14] sm:$0xf]
        %v1313 = vld [vmem:[%s1306 + $0x18] sm:$0xf]
        %v1314 = vld [vmem:[%s1306 + $0x1c] sm:$0xf]
        %v1323 = vunpack.c.l.b16 %v1307
        %v1324 = vunpack.c.l.b16 %v1308
        %v1325 = vunpack.c.l.b16 %v1309
        %v1326 = vunpack.c.l.b16 %v1310
        %v1327 = vunpack.c.l.b16 %v1311
        %v1328 = vunpack.c.l.b16 %v1312
        %v1329 = vunpack.c.l.b16 %v1313
        %v1330 = vunpack.c.l.b16 %v1314
        %v1331 = vpack.c.b16 %v1324, %v1323
        %v1332 = vpack.c.b16 %v1326, %v1325
        %v1333 = vpack.c.b16 %v1328, %v1327
        %v1334 = vpack.c.b16 %v1330, %v1329
        %v1336 = vsel %vm437, %v1331, 0
        %v1339 = vsel %vm437, %v1332, 0
        %v1342 = vsel %vm437, %v1333, 0
        %v1345 = vsel %vm437, %v1334, 0
        %1347 = vmatpush.bf16.msra.mxu0 0
        %1348 = vmatpush.bf16.msra.mxu0 0
        %1349 = vmatpush.bf16.msra.mxu0 0
        %1350 = vmatpush.bf16.msra.mxu0 0
        %1351 = vmatpush.bf16.msra.mxu0 %v1190
        %1352 = vmatpush.bf16.msra.mxu0 %v1189
        %1353 = vmatpush.bf16.msra.mxu0 %v1188
        %1354 = vmatpush.bf16.msra.mxu0 %v1187
        %1355 = vmatmul.bf16.gmra.mxu0 %v1336
        %v1356 = vpop.f32.mrf.mxu0
        %v1357 = vadd.f32 0.0, %v1356
        %v1358 = vpop.f32.mrf.mxu0
        %v1359 = vadd.f32 0.0, %v1358
        %1360 = vmatmul.bf16.gmra.mxu0 %v1339
        %v1361 = vpop.f32.mrf.mxu0
        %v1362 = vadd.f32 0.0, %v1361
        %v1363 = vpop.f32.mrf.mxu0
        %v1364 = vadd.f32 0.0, %v1363
        %1365 = vmatmul.bf16.gmra.mxu0 %v1342
        %v1366 = vpop.f32.mrf.mxu0
        %v1367 = vadd.f32 0.0, %v1366
        %v1368 = vpop.f32.mrf.mxu0
        %v1369 = vadd.f32 0.0, %v1368
        %1370 = vmatmul.bf16.gmra.mxu0 %v1345
        %v1371 = vpop.f32.mrf.mxu0
        %v1372 = vadd.f32 0.0, %v1371
        %v1373 = vpop.f32.mrf.mxu0
        %v1374 = vadd.f32 0.0, %v1373
        %1375 = vdwg.mxu0
        %1376 = vrot.lane.b32.xlu0 %v1217, 4
        %v1377 = vpop.permute.xlu0 %1376
        %1378 = vrot.lane.b32.xlu0 %v1219, 4
        %v1379 = vpop.permute.xlu0 %1378
        %1380 = vrot.lane.b32.xlu0 %v1222, 4
        %v1381 = vpop.permute.xlu0 %1380
        %1382 = vrot.lane.b32.xlu0 %v1224, 4
        %v1383 = vpop.permute.xlu0 %1382
        %1384 = vrot.lane.b32.xlu0 %v1227, 4
        %v1385 = vpop.permute.xlu0 %1384
        %1386 = vrot.lane.b32.xlu0 %v1229, 4
        %v1387 = vpop.permute.xlu0 %1386
        %1388 = vrot.lane.b32.xlu0 %v1232, 4
        %v1389 = vpop.permute.xlu0 %1388
        %1390 = vrot.lane.b32.xlu0 %v1234, 4
        %v1391 = vpop.permute.xlu0 %1390
        %v1392 = vadd.f32 %v1377, %v1287
        %v1393 = vadd.f32 %v1379, %v1289
        %v1394 = vadd.f32 %v1381, %v1292
        %v1395 = vadd.f32 %v1383, %v1294
        %v1396 = vadd.f32 %v1385, %v1297
        %v1397 = vadd.f32 %v1387, %v1299
        %v1398 = vadd.f32 %v1389, %v1302
        %v1399 = vadd.f32 %v1391, %v1304
        %1400 = vrot.lane.b32.xlu0 %v1357, 124
        %v1401 = vpop.permute.xlu0 %1400
        %1402 = vrot.lane.b32.xlu0 %v1359, 124
        %v1403 = vpop.permute.xlu0 %1402
        %1404 = vrot.lane.b32.xlu0 %v1362, 124
        %v1405 = vpop.permute.xlu0 %1404
        %1406 = vrot.lane.b32.xlu0 %v1364, 124
        %v1407 = vpop.permute.xlu0 %1406
        %1408 = vrot.lane.b32.xlu0 %v1367, 124
        %v1409 = vpop.permute.xlu0 %1408
        %1410 = vrot.lane.b32.xlu0 %v1369, 124
        %v1411 = vpop.permute.xlu0 %1410
        %1412 = vrot.lane.b32.xlu0 %v1372, 124
        %v1413 = vpop.permute.xlu0 %1412
        %1414 = vrot.lane.b32.xlu0 %v1374, 124
        %v1415 = vpop.permute.xlu0 %1414
        %v1416 = vadd.f32 %v1392, %v1401
        %v1417 = vadd.f32 %v1393, %v1403
        %v1418 = vadd.f32 %v1394, %v1405
        %v1419 = vadd.f32 %v1395, %v1407
        %v1420 = vadd.f32 %v1396, %v1409
        %v1421 = vadd.f32 %v1397, %v1411
        %v1422 = vadd.f32 %v1398, %v1413
        %v1423 = vadd.f32 %v1399, %v1415
        %s1424 = scalar_lea.vmem %s3, 128
        %v1425 = vld [vmem:[%s1424] sm:$0xff]
        %v1426 = vld [vmem:[%s1424 + $0x8] sm:$0xff]
        %v1427 = vld [vmem:[%s1424 + $0x10] sm:$0xff]
        %v1428 = vld [vmem:[%s1424 + $0x18] sm:$0xff]
        %v1429 = vld [vmem:[%s1424 + $0x20] sm:$0xff]
        %v1430 = vld [vmem:[%s1424 + $0x28] sm:$0xff]
        %v1431 = vld [vmem:[%s1424 + $0x30] sm:$0xff]
        %v1432 = vld [vmem:[%s1424 + $0x38] sm:$0xff]
        %1434 = vset.pattern.permute.xlu0 0
        %1435 = vperm.xlu0 %1434, %v1425
        %v1436 = vpop.permute.xlu0 %1435
        %1439 = vset.pattern.permute.xlu0 0
        %1440 = vperm.xlu0 %1439, %v1426
        %v1441 = vpop.permute.xlu0 %1440
        %1444 = vset.pattern.permute.xlu0 0
        %1445 = vperm.xlu0 %1444, %v1427
        %v1446 = vpop.permute.xlu0 %1445
        %1449 = vset.pattern.permute.xlu0 0
        %1450 = vperm.xlu0 %1449, %v1428
        %v1451 = vpop.permute.xlu0 %1450
        %1454 = vset.pattern.permute.xlu0 0
        %1455 = vperm.xlu0 %1454, %v1429
        %v1456 = vpop.permute.xlu0 %1455
        %1459 = vset.pattern.permute.xlu0 0
        %1460 = vperm.xlu0 %1459, %v1430
        %v1461 = vpop.permute.xlu0 %1460
        %1464 = vset.pattern.permute.xlu0 0
        %1465 = vperm.xlu0 %1464, %v1431
        %v1466 = vpop.permute.xlu0 %1465
        %1469 = vset.pattern.permute.xlu0 0
        %1470 = vperm.xlu0 %1469, %v1432
        %v1471 = vpop.permute.xlu0 %1470
        %v1473 = vadd.f32 %v1416, %v1436
        %v1474 = vadd.f32 %v1417, %v1441
        %v1475 = vadd.f32 %v1418, %v1446
        %v1476 = vadd.f32 %v1419, %v1451
        %v1477 = vadd.f32 %v1420, %v1456
        %v1478 = vadd.f32 %v1421, %v1461
        %v1479 = vadd.f32 %v1422, %v1466
        %v1480 = vadd.f32 %v1423, %v1471
        %v1481 = vmax.f32 %v1473, 0.0
        %v1482 = vmax.f32 %v1474, 0.0
        %v1483 = vmax.f32 %v1475, 0.0
        %v1484 = vmax.f32 %v1476, 0.0
        %v1485 = vmax.f32 %v1477, 0.0
        %v1486 = vmax.f32 %v1478, 0.0
        %v1487 = vmax.f32 %v1479, 0.0
        %v1488 = vmax.f32 %v1480, 0.0
        %v1489 = vmul.f32 %v1481, %v376
        %v1490 = vmul.f32 %v1482, %v376
        %v1491 = vmul.f32 %v1483, %v376
        %v1492 = vmul.f32 %v1484, %v376
        %v1493 = vmul.f32 %v1485, %v376
        %v1494 = vmul.f32 %v1486, %v376
        %v1495 = vmul.f32 %v1487, %v376
        %v1496 = vmul.f32 %v1488, %v376
        %v1497 = vpack.c.bf16 %v1489, %v1489
        %v1498 = vpack.c.bf16 %v1490, %v1490
        %v1499 = vpack.c.bf16 %v1491, %v1491
        %v1500 = vpack.c.bf16 %v1492, %v1492
        %v1501 = vpack.c.bf16 %v1493, %v1493
        %v1502 = vpack.c.bf16 %v1494, %v1494
        %v1503 = vpack.c.bf16 %v1495, %v1495
        %v1504 = vpack.c.bf16 %v1496, %v1496
        %1505 = vst [vmem:[#allocation2] sm:$0xf] %v1497
        %1506 = vst [vmem:[#allocation2 + $0x4] sm:$0xf] %v1498
        %1507 = vst [vmem:[#allocation2 + $0x8] sm:$0xf] %v1499
        %1508 = vst [vmem:[#allocation2 + $0xc] sm:$0xf] %v1500
        %1509 = vst [vmem:[#allocation2 + $0x10] sm:$0xf] %v1501
        %1510 = vst [vmem:[#allocation2 + $0x14] sm:$0xf] %v1502
        %1511 = vst [vmem:[#allocation2 + $0x18] sm:$0xf] %v1503
        %1512 = vst [vmem:[#allocation2 + $0x1c] sm:$0xf] %v1504
        %v1513 = vld [vmem:[#allocation2] sm:$0xf]
        %v1514 = vld [vmem:[#allocation2 + $0x4] sm:$0xf]
        %v1515 = vld [vmem:[#allocation2 + $0x8] sm:$0xf]
        %v1516 = vld [vmem:[#allocation2 + $0xc] sm:$0xf]
        %v1517 = vld [vmem:[#allocation2 + $0x10] sm:$0xf]
        %v1518 = vld [vmem:[#allocation2 + $0x14] sm:$0xf]
        %v1519 = vld [vmem:[#allocation2 + $0x18] sm:$0xf]
        %v1520 = vld [vmem:[#allocation2 + $0x1c] sm:$0xf]
        %s1521 = scalar_lea.vmem [#allocation3], 288
        %v1522 = vld [vmem:[%s1521] sm:$0xf]
        %v1523 = vld [vmem:[%s1521 + $0x4] sm:$0xf]
        %v1524 = vld [vmem:[%s1521 + $0x8] sm:$0xf]
        %v1525 = vld [vmem:[%s1521 + $0xc] sm:$0xf]
        %v1526 = vld [vmem:[%s1521 + $0x10] sm:$0xf]
        %v1527 = vld [vmem:[%s1521 + $0x14] sm:$0xf]
        %v1528 = vld [vmem:[%s1521 + $0x18] sm:$0xf]
        %v1529 = vld [vmem:[%s1521 + $0x1c] sm:$0xf]
        %v1538 = vunpack.c.l.b16 %v1522
        %v1539 = vunpack.c.l.b16 %v1523
        %v1540 = vunpack.c.l.b16 %v1524
        %v1541 = vunpack.c.l.b16 %v1525
        %v1542 = vunpack.c.l.b16 %v1526
        %v1543 = vunpack.c.l.b16 %v1527
        %v1544 = vunpack.c.l.b16 %v1528
        %v1545 = vunpack.c.l.b16 %v1529
        %v1546 = vpack.c.b16 %v1539, %v1538
        %v1547 = vpack.c.b16 %v1541, %v1540
        %v1548 = vpack.c.b16 %v1543, %v1542
        %v1549 = vpack.c.b16 %v1545, %v1544
        %v1558 = vunpack.c.l.b16 %v1513
        %v1559 = vunpack.c.l.b16 %v1514
        %v1560 = vunpack.c.l.b16 %v1515
        %v1561 = vunpack.c.l.b16 %v1516
        %v1562 = vunpack.c.l.b16 %v1517
        %v1563 = vunpack.c.l.b16 %v1518
        %v1564 = vunpack.c.l.b16 %v1519
        %v1565 = vunpack.c.l.b16 %v1520
        %v1566 = vpack.c.b16 %v1559, %v1558
        %v1567 = vpack.c.b16 %v1561, %v1560
        %v1568 = vpack.c.b16 %v1563, %v1562
        %v1569 = vpack.c.b16 %v1565, %v1564
        %v1575 = vsel %vm437, %v1546, 0
        %v1578 = vsel %vm437, %v1547, 0
        %v1581 = vsel %vm437, %v1548, 0
        %v1584 = vsel %vm437, %v1549, 0
        %1586 = vmatpush.bf16.msra.mxu0 0
        %1587 = vmatpush.bf16.msra.mxu0 0
        %1588 = vmatpush.bf16.msra.mxu0 0
        %1589 = vmatpush.bf16.msra.mxu0 0
        %1590 = vmatpush.bf16.msra.mxu0 %v1569
        %1591 = vmatpush.bf16.msra.mxu0 %v1568
        %1592 = vmatpush.bf16.msra.mxu0 %v1567
        %1593 = vmatpush.bf16.msra.mxu0 %v1566
        %1594 = vmatmul.bf16.gmra.mxu0 %v1575
        %v1595 = vpop.f32.mrf.mxu0
        %v1596 = vadd.f32 0.0, %v1595
        %v1597 = vpop.f32.mrf.mxu0
        %v1598 = vadd.f32 0.0, %v1597
        %1599 = vmatmul.bf16.gmra.mxu0 %v1578
        %v1600 = vpop.f32.mrf.mxu0
        %v1601 = vadd.f32 0.0, %v1600
        %v1602 = vpop.f32.mrf.mxu0
        %v1603 = vadd.f32 0.0, %v1602
        %1604 = vmatmul.bf16.gmra.mxu0 %v1581
        %v1605 = vpop.f32.mrf.mxu0
        %v1606 = vadd.f32 0.0, %v1605
        %v1607 = vpop.f32.mrf.mxu0
        %v1608 = vadd.f32 0.0, %v1607
        %1609 = vmatmul.bf16.gmra.mxu0 %v1584
        %v1610 = vpop.f32.mrf.mxu0
        %v1611 = vadd.f32 0.0, %v1610
        %v1612 = vpop.f32.mrf.mxu0
        %v1613 = vadd.f32 0.0, %v1612
        %1614 = vdwg.mxu0
        %s1615 = scalar_lea.vmem [#allocation3], 320
        %v1616 = vld [vmem:[%s1615] sm:$0xf]
        %v1617 = vld [vmem:[%s1615 + $0x4] sm:$0xf]
        %v1618 = vld [vmem:[%s1615 + $0x8] sm:$0xf]
        %v1619 = vld [vmem:[%s1615 + $0xc] sm:$0xf]
        %v1620 = vld [vmem:[%s1615 + $0x10] sm:$0xf]
        %v1621 = vld [vmem:[%s1615 + $0x14] sm:$0xf]
        %v1622 = vld [vmem:[%s1615 + $0x18] sm:$0xf]
        %v1623 = vld [vmem:[%s1615 + $0x1c] sm:$0xf]
        %v1632 = vunpack.c.l.b16 %v1616
        %v1633 = vunpack.c.l.b16 %v1617
        %v1634 = vunpack.c.l.b16 %v1618
        %v1635 = vunpack.c.l.b16 %v1619
        %v1636 = vunpack.c.l.b16 %v1620
        %v1637 = vunpack.c.l.b16 %v1621
        %v1638 = vunpack.c.l.b16 %v1622
        %v1639 = vunpack.c.l.b16 %v1623
        %v1640 = vpack.c.b16 %v1633, %v1632
        %v1641 = vpack.c.b16 %v1635, %v1634
        %v1642 = vpack.c.b16 %v1637, %v1636
        %v1643 = vpack.c.b16 %v1639, %v1638
        %v1645 = vsel %vm437, %v1640, 0
        %v1648 = vsel %vm437, %v1641, 0
        %v1651 = vsel %vm437, %v1642, 0
        %v1654 = vsel %vm437, %v1643, 0
        %1656 = vmatpush.bf16.msra.mxu0 0
        %1657 = vmatpush.bf16.msra.mxu0 0
        %1658 = vmatpush.bf16.msra.mxu0 0
        %1659 = vmatpush.bf16.msra.mxu0 0
        %1660 = vmatpush.bf16.msra.mxu0 %v1569
        %1661 = vmatpush.bf16.msra.mxu0 %v1568
        %1662 = vmatpush.bf16.msra.mxu0 %v1567
        %1663 = vmatpush.bf16.msra.mxu0 %v1566
        %1664 = vmatmul.bf16.gmra.mxu0 %v1645
        %v1665 = vpop.f32.mrf.mxu0
        %v1666 = vadd.f32 0.0, %v1665
        %v1667 = vpop.f32.mrf.mxu0
        %v1668 = vadd.f32 0.0, %v1667
        %1669 = vmatmul.bf16.gmra.mxu0 %v1648
        %v1670 = vpop.f32.mrf.mxu0
        %v1671 = vadd.f32 0.0, %v1670
        %v1672 = vpop.f32.mrf.mxu0
        %v1673 = vadd.f32 0.0, %v1672
        %1674 = vmatmul.bf16.gmra.mxu0 %v1651
        %v1675 = vpop.f32.mrf.mxu0
        %v1676 = vadd.f32 0.0, %v1675
        %v1677 = vpop.f32.mrf.mxu0
        %v1678 = vadd.f32 0.0, %v1677
        %1679 = vmatmul.bf16.gmra.mxu0 %v1654
        %v1680 = vpop.f32.mrf.mxu0
        %v1681 = vadd.f32 0.0, %v1680
        %v1682 = vpop.f32.mrf.mxu0
        %v1683 = vadd.f32 0.0, %v1682
        %1684 = vdwg.mxu0
        %s1685 = scalar_lea.vmem [#allocation3], 352
        %v1686 = vld [vmem:[%s1685] sm:$0xf]
        %v1687 = vld [vmem:[%s1685 + $0x4] sm:$0xf]
        %v1688 = vld [vmem:[%s1685 + $0x8] sm:$0xf]
        %v1689 = vld [vmem:[%s1685 + $0xc] sm:$0xf]
        %v1690 = vld [vmem:[%s1685 + $0x10] sm:$0xf]
        %v1691 = vld [vmem:[%s1685 + $0x14] sm:$0xf]
        %v1692 = vld [vmem:[%s1685 + $0x18] sm:$0xf]
        %v1693 = vld [vmem:[%s1685 + $0x1c] sm:$0xf]
        %v1702 = vunpack.c.l.b16 %v1686
        %v1703 = vunpack.c.l.b16 %v1687
        %v1704 = vunpack.c.l.b16 %v1688
        %v1705 = vunpack.c.l.b16 %v1689
        %v1706 = vunpack.c.l.b16 %v1690
        %v1707 = vunpack.c.l.b16 %v1691
        %v1708 = vunpack.c.l.b16 %v1692
        %v1709 = vunpack.c.l.b16 %v1693
        %v1710 = vpack.c.b16 %v1703, %v1702
        %v1711 = vpack.c.b16 %v1705, %v1704
        %v1712 = vpack.c.b16 %v1707, %v1706
        %v1713 = vpack.c.b16 %v1709, %v1708
        %v1715 = vsel %vm437, %v1710, 0
        %v1718 = vsel %vm437, %v1711, 0
        %v1721 = vsel %vm437, %v1712, 0
        %v1724 = vsel %vm437, %v1713, 0
        %1726 = vmatpush.bf16.msra.mxu0 0
        %1727 = vmatpush.bf16.msra.mxu0 0
        %1728 = vmatpush.bf16.msra.mxu0 0
        %1729 = vmatpush.bf16.msra.mxu0 0
        %1730 = vmatpush.bf16.msra.mxu0 %v1569
        %1731 = vmatpush.bf16.msra.mxu0 %v1568
        %1732 = vmatpush.bf16.msra.mxu0 %v1567
        %1733 = vmatpush.bf16.msra.mxu0 %v1566
        %1734 = vmatmul.bf16.gmra.mxu0 %v1715
        %v1735 = vpop.f32.mrf.mxu0
        %v1736 = vadd.f32 0.0, %v1735
        %v1737 = vpop.f32.mrf.mxu0
        %v1738 = vadd.f32 0.0, %v1737
        %1739 = vmatmul.bf16.gmra.mxu0 %v1718
        %v1740 = vpop.f32.mrf.mxu0
        %v1741 = vadd.f32 0.0, %v1740
        %v1742 = vpop.f32.mrf.mxu0
        %v1743 = vadd.f32 0.0, %v1742
        %1744 = vmatmul.bf16.gmra.mxu0 %v1721
        %v1745 = vpop.f32.mrf.mxu0
        %v1746 = vadd.f32 0.0, %v1745
        %v1747 = vpop.f32.mrf.mxu0
        %v1748 = vadd.f32 0.0, %v1747
        %1749 = vmatmul.bf16.gmra.mxu0 %v1724
        %v1750 = vpop.f32.mrf.mxu0
        %v1751 = vadd.f32 0.0, %v1750
        %v1752 = vpop.f32.mrf.mxu0
        %v1753 = vadd.f32 0.0, %v1752
        %1754 = vdwg.mxu0
        %1755 = vrot.lane.b32.xlu0 %v1596, 8
        %v1756 = vpop.permute.xlu0 %1755
        %1757 = vrot.lane.b32.xlu0 %v1598, 8
        %v1758 = vpop.permute.xlu0 %1757
        %1759 = vrot.lane.b32.xlu0 %v1601, 8
        %v1760 = vpop.permute.xlu0 %1759
        %1761 = vrot.lane.b32.xlu0 %v1603, 8
        %v1762 = vpop.permute.xlu0 %1761
        %1763 = vrot.lane.b32.xlu0 %v1606, 8
        %v1764 = vpop.permute.xlu0 %1763
        %1765 = vrot.lane.b32.xlu0 %v1608, 8
        %v1766 = vpop.permute.xlu0 %1765
        %1767 = vrot.lane.b32.xlu0 %v1611, 8
        %v1768 = vpop.permute.xlu0 %1767
        %1769 = vrot.lane.b32.xlu0 %v1613, 8
        %v1770 = vpop.permute.xlu0 %1769
        %v1771 = vadd.f32 %v1756, %v1666
        %v1772 = vadd.f32 %v1758, %v1668
        %v1773 = vadd.f32 %v1760, %v1671
        %v1774 = vadd.f32 %v1762, %v1673
        %v1775 = vadd.f32 %v1764, %v1676
        %v1776 = vadd.f32 %v1766, %v1678
        %v1777 = vadd.f32 %v1768, %v1681
        %v1778 = vadd.f32 %v1770, %v1683
        %1779 = vrot.lane.b32.xlu0 %v1736, 120
        %v1780 = vpop.permute.xlu0 %1779
        %1781 = vrot.lane.b32.xlu0 %v1738, 120
        %v1782 = vpop.permute.xlu0 %1781
        %1783 = vrot.lane.b32.xlu0 %v1741, 120
        %v1784 = vpop.permute.xlu0 %1783
        %1785 = vrot.lane.b32.xlu0 %v1743, 120
        %v1786 = vpop.permute.xlu0 %1785
        %1787 = vrot.lane.b32.xlu0 %v1746, 120
        %v1788 = vpop.permute.xlu0 %1787
        %1789 = vrot.lane.b32.xlu0 %v1748, 120
        %v1790 = vpop.permute.xlu0 %1789
        %1791 = vrot.lane.b32.xlu0 %v1751, 120
        %v1792 = vpop.permute.xlu0 %1791
        %1793 = vrot.lane.b32.xlu0 %v1753, 120
        %v1794 = vpop.permute.xlu0 %1793
        %v1795 = vadd.f32 %v1771, %v1780
        %v1796 = vadd.f32 %v1772, %v1782
        %v1797 = vadd.f32 %v1773, %v1784
        %v1798 = vadd.f32 %v1774, %v1786
        %v1799 = vadd.f32 %v1775, %v1788
        %v1800 = vadd.f32 %v1776, %v1790
        %v1801 = vadd.f32 %v1777, %v1792
        %v1802 = vadd.f32 %v1778, %v1794
        %s1803 = scalar_lea.vmem %s3, 192
        %v1804 = vld [vmem:[%s1803] sm:$0xff]
        %v1805 = vld [vmem:[%s1803 + $0x8] sm:$0xff]
        %v1806 = vld [vmem:[%s1803 + $0x10] sm:$0xff]
        %v1807 = vld [vmem:[%s1803 + $0x18] sm:$0xff]
        %v1808 = vld [vmem:[%s1803 + $0x20] sm:$0xff]
        %v1809 = vld [vmem:[%s1803 + $0x28] sm:$0xff]
        %v1810 = vld [vmem:[%s1803 + $0x30] sm:$0xff]
        %v1811 = vld [vmem:[%s1803 + $0x38] sm:$0xff]
        %1813 = vset.pattern.permute.xlu0 0
        %1814 = vperm.xlu0 %1813, %v1804
        %v1815 = vpop.permute.xlu0 %1814
        %1818 = vset.pattern.permute.xlu0 0
        %1819 = vperm.xlu0 %1818, %v1805
        %v1820 = vpop.permute.xlu0 %1819
        %1823 = vset.pattern.permute.xlu0 0
        %1824 = vperm.xlu0 %1823, %v1806
        %v1825 = vpop.permute.xlu0 %1824
        %1828 = vset.pattern.permute.xlu0 0
        %1829 = vperm.xlu0 %1828, %v1807
        %v1830 = vpop.permute.xlu0 %1829
        %1833 = vset.pattern.permute.xlu0 0
        %1834 = vperm.xlu0 %1833, %v1808
        %v1835 = vpop.permute.xlu0 %1834
        %1838 = vset.pattern.permute.xlu0 0
        %1839 = vperm.xlu0 %1838, %v1809
        %v1840 = vpop.permute.xlu0 %1839
        %1843 = vset.pattern.permute.xlu0 0
        %1844 = vperm.xlu0 %1843, %v1810
        %v1845 = vpop.permute.xlu0 %1844
        %1848 = vset.pattern.permute.xlu0 0
        %1849 = vperm.xlu0 %1848, %v1811
        %v1850 = vpop.permute.xlu0 %1849
        %v1852 = vadd.f32 %v1795, %v1815
        %v1853 = vadd.f32 %v1796, %v1820
        %v1854 = vadd.f32 %v1797, %v1825
        %v1855 = vadd.f32 %v1798, %v1830
        %v1856 = vadd.f32 %v1799, %v1835
        %v1857 = vadd.f32 %v1800, %v1840
        %v1858 = vadd.f32 %v1801, %v1845
        %v1859 = vadd.f32 %v1802, %v1850
        %v1860 = vmax.f32 %v1852, 0.0
        %v1861 = vmax.f32 %v1853, 0.0
        %v1862 = vmax.f32 %v1854, 0.0
        %v1863 = vmax.f32 %v1855, 0.0
        %v1864 = vmax.f32 %v1856, 0.0
        %v1865 = vmax.f32 %v1857, 0.0
        %v1866 = vmax.f32 %v1858, 0.0
        %v1867 = vmax.f32 %v1859, 0.0
        %v1868 = vld [vmem:[%s4] sm:$0xf]
        %v1869 = vld [vmem:[%s4 + $0x4] sm:$0xf]
        %v1870 = vpack.c.bf16 %v1861, %v1860
        %v1871 = vpack.c.bf16 %v1863, %v1862
        %v1872 = vpack.c.bf16 %v1865, %v1864
        %v1873 = vpack.c.bf16 %v1867, %v1866
        %v1876 = vunpack.c.l.b16 %v1868
        %v1877 = vunpack.c.l.b16 %v1869
        %v1878 = vpack.c.b16 %v1877, %v1876
        %v1880 = vsel %vm437, %v1878, 0
        %1882 = vmatpush.bf16.msra.mxu0 0
        %1883 = vmatpush.bf16.msra.mxu0 0
        %1884 = vmatpush.bf16.msra.mxu0 0
        %1885 = vmatpush.bf16.msra.mxu0 0
        %1886 = vmatpush.bf16.msra.mxu0 %v1873
        %1887 = vmatpush.bf16.msra.mxu0 %v1872
        %1888 = vmatpush.bf16.msra.mxu0 %v1871
        %1889 = vmatpush.bf16.msra.mxu0 %v1870
        %1890 = vmatmul.bf16.gmra.mxu0 %v1880
        %v1891 = vpop.f32.mrf.mxu0
        %v1892 = vadd.f32 0.0, %v1891
        %v1893 = vpop.f32.mrf.mxu0
        %v1894 = vadd.f32 0.0, %v1893
        %1895 = vdwg.mxu0
        %1896 = vst [vmem:[%s258] sm:$0xff] %v1892
        %1897 = vst [vmem:[%s258 + $0x8] sm:$0xff] %v1894
        %s1898 = sand.u32 %s154, 1
        %s1899 = scalar_lea.sflag [#allocation5], %s1898
        %s1900 = sand.u32 %s154, 1
        %s1901 = smul.addr %s1900, 16
        %s1902 = scalar_lea.vmem [#allocation6], %s1901
        // Predicated region
        $region45: #{tpu_custom_call.1} parent=39 // pred_check
          %p1903 = pneg %p164
        $region46: #{tpu_custom_call.1} parent=39 // pred_check_branch
          %1905 = sbr.rel (%p1903) target = $region48
        $region47: #{tpu_custom_call.1} parent=39 // pred_region
          %1907 = vsyncadd %s1899, 0
          %s1908 = smul.addr %s25, 2
          %s1909 = smul.addr %s24, 2
          %s1910 = sadd.s32 %s1908, %s1909
          %s1911 = smul.addr %s1910, 8
          %s1912 = scalar_lea.hbm %s5, %s1911
          %s1913 = sshll.u32 %s1902, 4
          %s1914 = int_to_ptr.vmem [resolvable:$true] %s1913
          %s1915 = sshll.u32 %s1912, 4
          %s1916 = int_to_ptr.hbm [resolvable:$true] %s1915
          %1921 = dma.vmem_to_hbm [thread:$0]  %s1914, 256, %s1916, %s1899, 128, 128, 8
        $region48: #{tpu_custom_call.1} parent=39 // pred_fallthru
          _
      $region40: #{tpu_custom_call.1} parent=5 // pred_fallthru
        _
      %p1922 = scmp.le.s32.totalorder 2, %s15
      // Predicated region
      $region49: #{tpu_custom_call.1} parent=5 // pred_check
        %p1923 = pneg %p1922
      $region50: #{tpu_custom_call.1} parent=5 // pred_check_branch
        %1925 = sbr.rel (%p1923) target = $region52
      $region51: #{tpu_custom_call.1} parent=5 // pred_region
        %s1926 = ssub.s32 %s15, 2
        // Predicated region
        $region53: #{tpu_custom_call.1} parent=51 // pred_check
          %p1927 = pneg %p170
        $region54: #{tpu_custom_call.1} parent=51 // pred_check_branch
          %1929 = sbr.rel (%p1927) target = $region56
        $region55: #{tpu_custom_call.1} parent=51 // pred_region
          %s1930 = sand.u32 %s155, 1
          %s1931 = scalar_lea.sflag [#allocation5], %s1930
          %s1932 = sand.u32 %s155, 1
          %s1933 = smul.addr %s1932, 16
          %s1934 = scalar_lea.vmem [#allocation6], %s1933
          %1936 = dma.done %s1931, 256
        $region56: #{tpu_custom_call.1} parent=51 // pred_fallthru
          _
      $region52: #{tpu_custom_call.1} parent=5 // pred_fallthru
        _
    $region6: #{tpu_custom_call.1} parent=1 // loop_footer
      %s19 = sadd.s32 1, %s15
    $region7: #{tpu_custom_call.1} parent=1 // loop_footer_branch
      %14 = sbr.rel target = $region3
    $region8: #{tpu_custom_call.1} parent=1 // loop_exit
      _
    %1937 = vsyncpa [#allocation4], 1
    %s1938 = scalar_lea.sflag [#allocation4], 1
    %1939 = vsyncpa %s1938, 1
    %1940 = vsyncpa [#allocation5], 1
    %s1941 = scalar_lea.sflag [#allocation5], 1
    %1942 = vsyncpa %s1941, 1

</llo_original>
